<compile_context>
chip_gen: v7x
topology: tpu7x:2x2x1
jax: 0.10.0
libtpu: 0.0.40
codegen_flags: <defaults>
</compile_context>

<pallas_src>
import functools
import numpy as np

import jax
import jax.numpy as jnp
from jax.experimental import pallas as pl
from jax.experimental.pallas import tpu as pltpu

F32 = jnp.float32


# --------------------------------------------------------------------------
# Fused GAMENet kernel:
#   fused GCN(ehr)+GCN(ddi)  -> drug_memory
#   fused dual GRU (block-diag W_hh, hoisted input proj) -> h history
#   single post-loop query projection
#   memory read (softmax attention over drug memory + visit history)
#   output MLP -> lane-padded logits
# --------------------------------------------------------------------------
def gamenet_kernel(
    x12_ref,                                   # (T, 2E)  [i1 | i2]
    wih_ref, whh_ref, bih_ref, bhh_ref,        # fused GRU weights
    adj_ref, gw1_ref, gb1_ref, gw2_ref, gb2_ref,  # fused GCN weights
    inter_ref,                                 # SMEM scalar
    wq_ref, bq_ref,                            # query projection
    hv_ref,                                    # history one-hot values
    w1_ref, b1_ref, w2_ref, b2_ref,            # output MLP
    out_ref,                                   # (1, V_pad) logits
    hh_scratch,                                # (T, 2H) VMEM scratch
    *, use_history):
    T = x12_ref.shape[0]
    twoH = whh_ref.shape[0]
    H = twoH // 2
    twoV = adj_ref.shape[0]
    V = twoV // 2
    E = gw2_ref.shape[0]

    # ---------------- fused GCNs (block-diagonal adjacency) ----------------
    # per block: h = relu(adj@W1 + b1); out = adj@(h@W2) + b2   (x = I)
    adj = adj_ref[...]
    h_g = jnp.maximum(
        jnp.dot(adj, gw1_ref[...], preferred_element_type=F32) + gb1_ref[...], 0.0)  # (2V, E)
    t_g = jnp.dot(h_g, gw2_ref[...], preferred_element_type=F32)                     # (2V, 2E)
    o_g = jnp.dot(adj, t_g, preferred_element_type=F32)                              # (2V, 2E)
    dm_e = o_g[0:V, 0:E] + gb2_ref[:, 0:E]                 # ehr GCN output
    dm_d = o_g[V:2 * V, E:2 * E] + gb2_ref[:, E:2 * E]     # ddi GCN output
    dm = dm_e - inter_ref[0] * dm_d                        # (V, E) drug memory

    # ---------------- fused dual GRU ---------------------------------------
    # gate layout along 6H columns: [r1 r2 z1 z2 n1 n2]; h = [h1 | h2] (1, 2H)
    xg = jnp.dot(x12_ref[...], wih_ref[...], preferred_element_type=F32) + bih_ref[...]  # (T, 6H)
    whh = whh_ref[...]
    bhh = bhh_ref[...]

    h = jnp.zeros((1, twoH), F32)
    for t in range(T):                          # T static & small -> unrolled
        hg = jnp.dot(h, whh, preferred_element_type=F32) + bhh          # (1, 6H)
        x_t = xg[t:t + 1, :]
        rz = jax.nn.sigmoid(x_t[:, 0:4 * H] + hg[:, 0:4 * H])           # (1, 4H)
        r = rz[:, 0:2 * H]
        z = rz[:, 2 * H:4 * H]
        n = jnp.tanh(x_t[:, 4 * H:6 * H] + r * hg[:, 4 * H:6 * H])      # (1, 2H)
        h = (1.0 - z) * n + z * h
        hh_scratch[t:t + 1, :] = h

    # one matmul for ALL query rows (off the recurrence critical path)
    queries = (jnp.dot(jnp.maximum(hh_scratch[...], 0.0), wq_ref[...],
                       preferred_element_type=F32) + bq_ref[...])       # (T, E)
    query = queries[T - 1:T, :]                                         # (1, E)

    # ---------------- memory read (I/O) ------------------------------------
    s1 = jax.lax.dot_general(query, dm, (((1,), (1,)), ((), ())),
                             preferred_element_type=F32)                # (1, V)
    kw1 = jax.nn.softmax(s1, axis=-1)
    fact1 = jnp.dot(kw1, dm, preferred_element_type=F32)                # (1, E)

    if use_history:
        hkeys = queries[0:T - 1, :]                                     # (T-1, E)
        s2 = jax.lax.dot_general(query, hkeys, (((1,), (1,)), ((), ())),
                                 preferred_element_type=F32)            # (1, T-1)
        vw = jax.nn.softmax(s2, axis=-1)
        wv = jnp.dot(vw, hv_ref[...], preferred_element_type=F32)       # (1, V)
        fact2 = jnp.dot(wv, dm, preferred_element_type=F32)             # (1, E)
    else:
        fact2 = fact1

    # ---------------- output MLP (W1 sliced row-block-wise, no concat) -----
    w1 = w1_ref[...]
    hmlp = (jnp.dot(jnp.maximum(query, 0.0), w1[0:E, :], preferred_element_type=F32) +
            jnp.dot(jnp.maximum(fact1, 0.0), w1[E:2 * E, :], preferred_element_type=F32) +
            jnp.dot(jnp.maximum(fact2, 0.0), w1[2 * E:3 * E, :], preferred_element_type=F32) +
            b1_ref[...])
    hmlp = jnp.maximum(hmlp, 0.0)
    out_ref[...] = jnp.dot(hmlp, w2_ref[...], preferred_element_type=F32) + b2_ref[...]


# --------------------------------------------------------------------------
# Host-side glue
# --------------------------------------------------------------------------
def row_normalize(mx):
    rowsum = mx.sum(axis=1)
    r_inv = np.where(rowsum == 0.0, 0.0, 1.0 / rowsum)
    return np.diagflat(r_inv).dot(mx)


def make_params(key, vocab_size, emb_dim):
    V_med = vocab_size[2]
    E, H = emb_dim, 2 * emb_dim
    ks = iter(jax.random.split(key, 32))
    u = lambda shape, scale: jax.random.uniform(next(ks), shape, F32, -scale, scale)

    p = {}
    p["emb0"] = u((vocab_size[0], E), 0.1)
    p["emb1"] = u((vocab_size[1], E), 0.1)
    kgru = 1.0 / np.sqrt(H)
    for i in (0, 1):
        p[f"gru{i}_wih"] = u((3, E, H), kgru)
        p[f"gru{i}_whh"] = u((3, H, H), kgru)
        p[f"gru{i}_bih"] = u((3, 1, H), kgru)
        p[f"gru{i}_bhh"] = u((3, 1, H), kgru)
    p["wq"] = u((4 * E, E), 1.0 / np.sqrt(4 * E))
    p["bq"] = u((1, E), 1.0 / np.sqrt(4 * E))
    for name in ("ehr", "ddi"):
        p[f"{name}_w1"] = u((V_med, E), 1.0 / np.sqrt(E))
        p[f"{name}_b1"] = u((1, E), 1.0 / np.sqrt(E))
        p[f"{name}_w2"] = u((E, E), 1.0 / np.sqrt(E))
        p[f"{name}_b2"] = u((1, E), 1.0 / np.sqrt(E))
    p["inter"] = u((), 0.1)
    p["out_w1"] = u((3 * E, 2 * E), 1.0 / np.sqrt(3 * E))
    p["out_b1"] = u((1, 2 * E), 1.0 / np.sqrt(3 * E))
    p["out_w2"] = u((2 * E, V_med), 1.0 / np.sqrt(2 * E))
    p["out_b2"] = u((1, V_med), 1.0 / np.sqrt(2 * E))
    return p


def _gate_col(stream, gate, H):
    # gate layout along 6H columns: [r1 r2 z1 z2 n1 n2]
    return (2 * gate + stream) * H


def pack_gamenet(params, ehr_adj_norm, ddi_adj_norm, vocab_size, emb_dim):
    """One-time weight packing (hoisted out of the per-call forward)."""
    E, H = emb_dim, 2 * emb_dim
    V = vocab_size[2]
    V_pad = ((V + 127) // 128) * 128

    # ---- fused GRU weights: gate layout [r1 r2 z1 z2 n1 n2] ----
    wih_cat = np.zeros((2 * E, 6 * H), np.float32)
    whh_cat = np.zeros((2 * H, 6 * H), np.float32)
    bih_cat = np.zeros((1, 6 * H), np.float32)
    bhh_cat = np.zeros((1, 6 * H), np.float32)
    for s in (0, 1):
        wih = np.asarray(params[f"gru{s}_wih"])   # (3, E, H)
        whh = np.asarray(params[f"gru{s}_whh"])   # (3, H, H)
        bih = np.asarray(params[f"gru{s}_bih"])   # (3, 1, H)
        bhh = np.asarray(params[f"gru{s}_bhh"])   # (3, 1, H)
        for g in range(3):
            c = _gate_col(s, g, H)
            wih_cat[s * E:(s + 1) * E, c:c + H] = wih[g]
            whh_cat[s * H:(s + 1) * H, c:c + H] = whh[g]
            bih_cat[0, c:c + H] = bih[g, 0]
            bhh_cat[0, c:c + H] = bhh[g, 0]

    # ---- fused GCN weights: block-diagonal adjacency, stacked W/b ----
    adj_blk = np.zeros((2 * V, 2 * V), np.float32)
    adj_blk[0:V, 0:V] = np.asarray(ehr_adj_norm)
    adj_blk[V:2 * V, V:2 * V] = np.asarray(ddi_adj_norm)
    gw1 = np.concatenate([np.asarray(params["ehr_w1"]),
                          np.asarray(params["ddi_w1"])], axis=0)                  # (2V, E)
    gb1 = np.concatenate([np.broadcast_to(np.asarray(params["ehr_b1"]), (V, E)),
                          np.broadcast_to(np.asarray(params["ddi_b1"]), (V, E))],
                         axis=0)                                                  # (2V, E)
    gw2 = np.concatenate([np.asarray(params["ehr_w2"]),
                          np.asarray(params["ddi_w2"])], axis=1)                  # (E, 2E)
    gb2 = np.concatenate([np.asarray(params["ehr_b2"]),
                          np.asarray(params["ddi_b2"])], axis=1)                  # (1, 2E)

    # ---- lane-padded output head ----
    w2_pad = np.zeros((2 * E, V_pad), np.float32)
    w2_pad[:, :V] = np.asarray(params["out_w2"])
    b2_pad = np.zeros((1, V_pad), np.float32)
    b2_pad[:, :V] = np.asarray(params["out_b2"])

    packed = {
        "wih_cat": jnp.asarray(wih_cat), "whh_cat": jnp.asarray(whh_cat),
        "bih_cat": jnp.asarray(bih_cat), "bhh_cat": jnp.asarray(bhh_cat),
        "adj_blk": jnp.asarray(adj_blk),
        "gw1": jnp.asarray(gw1), "gb1": jnp.asarray(gb1),
        "gw2": jnp.asarray(gw2), "gb2": jnp.asarray(gb2),
        "inter": params["inter"].reshape(1),
        "wq": params["wq"], "bq": params["bq"],
        "w1": params["out_w1"], "b1": params["out_b1"],
        "w2_pad": jnp.asarray(w2_pad), "b2_pad": jnp.asarray(b2_pad),
        "V_pad": V_pad,
    }
    return jax.device_put(packed)


def gamenet_forward(packed, params, admissions, emb_dim, vocab_size):
    E = emb_dim
    H = 2 * E
    T = len(admissions)
    V = vocab_size[2]
    V_pad = packed["w2_pad"].shape[1]

    # mean_embedding(dropout(Embedding(codes))) -- dropout identity in eval
    i1 = jnp.stack([params["emb0"][jnp.array(adm[0])].mean(axis=0) for adm in admissions])  # (T, E)
    i2 = jnp.stack([params["emb1"][jnp.array(adm[1])].mean(axis=0) for adm in admissions])  # (T, E)
    x12 = jnp.concatenate([i1, i2], axis=-1)                                                # (T, 2E)

    use_history = T > 1
    if use_history:
        hv = np.zeros((T - 1, V), np.float32)
        for idx in range(T - 1):
            hv[idx, admissions[idx][2]] = 1.0
        history_values = jnp.asarray(hv)
    else:
        history_values = jnp.zeros((1, V), F32)          # dummy, unused

    vmem = lambda: pl.BlockSpec(memory_space=pltpu.MemorySpace.VMEM)
    smem = pl.BlockSpec(memory_space=pltpu.MemorySpace.SMEM)
    in_specs = [vmem() for _ in range(10)] + [smem] + [vmem() for _ in range(7)]

    kern = functools.partial(gamenet_kernel, use_history=use_history)
    out_pad = pl.pallas_call(
        kern,
        out_shape=jax.ShapeDtypeStruct((1, V_pad), F32),
        in_specs=in_specs,
        out_specs=vmem(),
        scratch_shapes=[pltpu.VMEM((T, 2 * H), F32)],
    )(x12,
      packed["wih_cat"], packed["whh_cat"], packed["bih_cat"], packed["bhh_cat"],
      packed["adj_blk"], packed["gw1"], packed["gb1"], packed["gw2"], packed["gb2"],
      packed["inter"],
      packed["wq"], packed["bq"],
      history_values,
      packed["w1"], packed["b1"], packed["w2_pad"], packed["b2_pad"])

    return out_pad[:, :V]                                # (1, V_med) logits


# --------------------------------------------------------------------------
# Pure-JAX reference (mirrors PyTorch eval forward) for correctness check
# --------------------------------------------------------------------------
def reference_forward(params, admissions, ehr_adj_norm, ddi_adj_norm, emb_dim, vocab_size):
    E = emb_dim
    T = len(admissions)
    V_med = vocab_size[2]

    i1 = jnp.stack([params["emb0"][jnp.array(adm[0])].mean(axis=0) for adm in admissions])
    i2 = jnp.stack([params["emb1"][jnp.array(adm[1])].mean(axis=0) for adm in admissions])

    def gru_ref(x, wih, whh, bih, bhh):
        H = whh.shape[1]
        h = jnp.zeros((1, H), F32)
        outs = []
        for t in range(x.shape[0]):
            x_t = x[t:t + 1]
            r = jax.nn.sigmoid(x_t @ wih[0] + bih[0] + h @ whh[0] + bhh[0])
            z = jax.nn.sigmoid(x_t @ wih[1] + bih[1] + h @ whh[1] + bhh[1])
            n = jnp.tanh(x_t @ wih[2] + bih[2] + r * (h @ whh[2] + bhh[2]))
            h = (1.0 - z) * n + z * h
            outs.append(h)
        return jnp.concatenate(outs, axis=0)

    o1 = gru_ref(i1, params["gru0_wih"], params["gru0_whh"], params["gru0_bih"], params["gru0_bhh"])
    o2 = gru_ref(i2, params["gru1_wih"], params["gru1_whh"], params["gru1_bih"], params["gru1_bhh"])
    pr = jnp.concatenate([o1, o2], axis=-1)

    def gcn_ref(adj, w1, b1, w2, b2):
        h = jnp.maximum(adj @ w1 + b1, 0.0)
        return adj @ (h @ w2) + b2

    ehr_emb = gcn_ref(ehr_adj_norm, params["ehr_w1"], params["ehr_b1"],
                      params["ehr_w2"], params["ehr_b2"])
    ddi_emb = gcn_ref(ddi_adj_norm, params["ddi_w1"], params["ddi_b1"],
                      params["ddi_w2"], params["ddi_b2"])
    dm = ehr_emb - ddi_emb * params["inter"]

    queries = jnp.maximum(pr, 0.0) @ params["wq"] + params["bq"]
    query = queries[-1:]
    kw1 = jax.nn.softmax(query @ dm.T, axis=-1)
    fact1 = kw1 @ dm
    if T > 1:
        hkeys = queries[:-1]
        hv = np.zeros((T - 1, V_med), np.float32)
        for idx in range(T - 1):
            hv[idx, admissions[idx][2]] = 1.0
        vw = jax.nn.softmax(query @ hkeys.T, axis=-1)
        fact2 = (vw @ jnp.asarray(hv)) @ dm
    else:
        fact2 = fact1
    cat = jnp.concatenate([query, fact1, fact2], axis=-1)
    h = jnp.maximum(jnp.maximum(cat, 0.0) @ params["out_w1"] + params["out_b1"], 0.0)
    return h @ params["out_w2"] + params["out_b2"]


# --------------------------------------------------------------------------
if __name__ == "__main__":
    vocab_size = (64, 48, 32)   # (diagnosis, procedure, medication) vocabs
    emb_dim = 16
    V_med = vocab_size[2]

    # deterministic synthetic adjacency matrices
    rng = np.random.RandomState(0)
    ehr_adj = (rng.rand(V_med, V_med) > 0.8).astype(np.float32)
    ehr_adj = np.maximum(ehr_adj, ehr_adj.T); np.fill_diagonal(ehr_adj, 0.0)
    ddi_adj = (rng.rand(V_med, V_med) > 0.9).astype(np.float32)
    ddi_adj = np.maximum(ddi_adj, ddi_adj.T); np.fill_diagonal(ddi_adj, 0.0)
    ehr_adj_norm = jnp.asarray(row_normalize(ehr_adj + np.eye(V_med)), F32)
    ddi_adj_norm = jnp.asarray(row_normalize(ddi_adj + np.eye(V_med)), F32)

    # one patient = list of admissions; adm = ([diag ids], [proc ids], [med ids])
    admissions = [
        ([3, 10, 7, 25], [1, 5, 9], [2, 8, 15, 30, 4]),
        ([12, 40, 2], [6, 7], [1, 19, 22]),
        ([0, 33, 18, 9, 50], [11, 3, 20], [5, 27]),
    ]

    params = make_params(jax.random.PRNGKey(0), vocab_size, emb_dim)

    # one-time weight packing (kept on device), hoisted out of the forward
    packed = pack_gamenet(params, ehr_adj_norm, ddi_adj_norm, vocab_size, emb_dim)

    out = gamenet_forward(packed, params, admissions, emb_dim, vocab_size)
    out = jax.block_until_ready(out)

    ref = jax.block_until_ready(
        reference_forward(params, admissions, ehr_adj_norm, ddi_adj_norm,
                          emb_dim, vocab_size))

    assert out.shape == (1, V_med), out.shape
    np.testing.assert_allclose(np.asarray(out), np.asarray(ref), rtol=1e-3, atol=1e-3)
    print("KERNEL_OK")
</pallas_src>

<mosaic_0001>
module attributes {stable_mosaic.version = 11 : i64} {
  func.func @gamenet_kernel(%arg0: memref<3x32xf32, #tpu.memory_space<vmem>>, %arg1: memref<32x192xf32, #tpu.memory_space<vmem>>, %arg2: memref<64x192xf32, #tpu.memory_space<vmem>>, %arg3: memref<1x192xf32, #tpu.memory_space<vmem>>, %arg4: memref<1x192xf32, #tpu.memory_space<vmem>>, %arg5: memref<64x64xf32, #tpu.memory_space<vmem>>, %arg6: memref<64x16xf32, #tpu.memory_space<vmem>>, %arg7: memref<64x16xf32, #tpu.memory_space<vmem>>, %arg8: memref<16x32xf32, #tpu.memory_space<vmem>>, %arg9: memref<1x32xf32, #tpu.memory_space<vmem>>, %arg10: memref<1xf32, #tpu.memory_space<smem>>, %arg11: memref<64x16xf32, #tpu.memory_space<vmem>>, %arg12: memref<1x16xf32, #tpu.memory_space<vmem>>, %arg13: memref<2x32xf32, #tpu.memory_space<vmem>>, %arg14: memref<48x32xf32, #tpu.memory_space<vmem>>, %arg15: memref<1x32xf32, #tpu.memory_space<vmem>>, %arg16: memref<32x128xf32, #tpu.memory_space<vmem>>, %arg17: memref<1x128xf32, #tpu.memory_space<vmem>>, %arg18: memref<1x128xf32, #tpu.memory_space<vmem>>, %arg19: memref<3x64xf32, #tpu.memory_space<vmem>>) attributes {dimension_semantics = [], scalar_prefetch = 0 : i64, scratch_operands = 1 : i64, tpu.core_type = #tpu.core_type<tc>} {
    %c0 = arith.constant 0 : index
    %c0_0 = arith.constant 0 : index
    %0 = vector.load %arg5[%c0, %c0_0] : memref<64x64xf32, #tpu.memory_space<vmem>>, vector<64x64xf32>
    %c0_1 = arith.constant 0 : index
    %c0_2 = arith.constant 0 : index
    %1 = vector.load %arg6[%c0_1, %c0_2] : memref<64x16xf32, #tpu.memory_space<vmem>>, vector<64x16xf32>
    %cst = arith.constant dense<0.000000e+00> : vector<64x16xf32>
    %2 = tpu.matmul %0, %1, %cst {dimension_numbers = #tpu.dot_dimension_numbers<[1], [0], [0], [1], [0, 0, 1, 1], [], []>} : vector<64x64xf32>, vector<64x16xf32>, vector<64x16xf32> -> vector<64x16xf32>
    %c0_3 = arith.constant 0 : index
    %c0_4 = arith.constant 0 : index
    %3 = vector.load %arg7[%c0_3, %c0_4] : memref<64x16xf32, #tpu.memory_space<vmem>>, vector<64x16xf32>
    %4 = arith.addf %2, %3 : vector<64x16xf32>
    %cst_5 = arith.constant 0.000000e+00 : f32
    %5 = vector.broadcast %cst_5 : f32 to vector<64x16xf32>
    %6 = arith.maximumf %4, %5 : vector<64x16xf32>
    %c0_6 = arith.constant 0 : index
    %c0_7 = arith.constant 0 : index
    %7 = vector.load %arg8[%c0_6, %c0_7] : memref<16x32xf32, #tpu.memory_space<vmem>>, vector<16x32xf32>
    %cst_8 = arith.constant dense<0.000000e+00> : vector<64x32xf32>
    %8 = tpu.matmul %6, %7, %cst_8 {dimension_numbers = #tpu.dot_dimension_numbers<[1], [0], [0], [1], [0, 0, 1, 1], [], []>} : vector<64x16xf32>, vector<16x32xf32>, vector<64x32xf32> -> vector<64x32xf32>
    %cst_9 = arith.constant dense<0.000000e+00> : vector<64x32xf32>
    %9 = tpu.matmul %0, %8, %cst_9 {dimension_numbers = #tpu.dot_dimension_numbers<[1], [0], [0], [1], [0, 0, 1, 1], [], []>} : vector<64x64xf32>, vector<64x32xf32>, vector<64x32xf32> -> vector<64x32xf32>
    %10 = vector.extract_strided_slice %9 {offsets = [0, 0], sizes = [32, 16], strides = [1, 1]} : vector<64x32xf32> to vector<32x16xf32>
    %c0_10 = arith.constant 0 : index
    %c0_11 = arith.constant 0 : index
    %11 = vector.load %arg9[%c0_10, %c0_11] : memref<1x32xf32, #tpu.memory_space<vmem>>, vector<1x16xf32>
    %12 = vector.broadcast %11 : vector<1x16xf32> to vector<32x16xf32>
    %13 = arith.addf %10, %12 : vector<32x16xf32>
    %14 = vector.extract_strided_slice %9 {offsets = [32, 16], sizes = [32, 16], strides = [1, 1]} : vector<64x32xf32> to vector<32x16xf32>
    %c0_12 = arith.constant 0 : index
    %c16 = arith.constant 16 : index
    %15 = vector.load %arg9[%c0_12, %c16] : memref<1x32xf32, #tpu.memory_space<vmem>>, vector<1x16xf32>
    %16 = vector.broadcast %15 : vector<1x16xf32> to vector<32x16xf32>
    %17 = arith.addf %14, %16 : vector<32x16xf32>
    %c0_13 = arith.constant 0 : index
    %18 = memref.load %arg10[%c0_13] : memref<1xf32, #tpu.memory_space<smem>>
    %19 = vector.broadcast %18 : f32 to vector<32x16xf32>
    %20 = arith.mulf %19, %17 : vector<32x16xf32>
    %21 = arith.subf %13, %20 : vector<32x16xf32>
    %c0_14 = arith.constant 0 : index
    %c0_15 = arith.constant 0 : index
    %22 = vector.load %arg0[%c0_14, %c0_15] : memref<3x32xf32, #tpu.memory_space<vmem>>, vector<3x32xf32>
    %c0_16 = arith.constant 0 : index
    %c0_17 = arith.constant 0 : index
    %23 = vector.load %arg1[%c0_16, %c0_17] : memref<32x192xf32, #tpu.memory_space<vmem>>, vector<32x192xf32>
    %cst_18 = arith.constant dense<0.000000e+00> : vector<3x192xf32>
    %24 = tpu.matmul %22, %23, %cst_18 {dimension_numbers = #tpu.dot_dimension_numbers<[1], [0], [0], [1], [0, 0, 1, 1], [], []>} : vector<3x32xf32>, vector<32x192xf32>, vector<3x192xf32> -> vector<3x192xf32>
    %c0_19 = arith.constant 0 : index
    %c0_20 = arith.constant 0 : index
    %25 = vector.load %arg3[%c0_19, %c0_20] : memref<1x192xf32, #tpu.memory_space<vmem>>, vector<1x192xf32>
    %26 = vector.broadcast %25 : vector<1x192xf32> to vector<3x192xf32>
    %27 = arith.addf %24, %26 : vector<3x192xf32>
    %c0_21 = arith.constant 0 : index
    %c0_22 = arith.constant 0 : index
    %28 = vector.load %arg2[%c0_21, %c0_22] : memref<64x192xf32, #tpu.memory_space<vmem>>, vector<64x192xf32>
    %c0_23 = arith.constant 0 : index
    %c0_24 = arith.constant 0 : index
    %29 = vector.load %arg4[%c0_23, %c0_24] : memref<1x192xf32, #tpu.memory_space<vmem>>, vector<1x192xf32>
    %cst_25 = arith.constant 0.000000e+00 : f32
    %30 = vector.broadcast %cst_25 : f32 to vector<1x64xf32>
    %cst_26 = arith.constant dense<0.000000e+00> : vector<1x192xf32>
    %31 = tpu.matmul %30, %28, %cst_26 {dimension_numbers = #tpu.dot_dimension_numbers<[1], [0], [0], [1], [0, 0, 1, 1], [], []>} : vector<1x64xf32>, vector<64x192xf32>, vector<1x192xf32> -> vector<1x192xf32>
    %32 = arith.addf %31, %29 : vector<1x192xf32>
    %33 = vector.extract_strided_slice %27 {offsets = [0, 0], sizes = [1, 192], strides = [1, 1]} : vector<3x192xf32> to vector<1x192xf32>
    %34 = vector.extract_strided_slice %33 {offsets = [0, 0], sizes = [1, 128], strides = [1, 1]} : vector<1x192xf32> to vector<1x128xf32>
    %35 = vector.extract_strided_slice %32 {offsets = [0, 0], sizes = [1, 128], strides = [1, 1]} : vector<1x192xf32> to vector<1x128xf32>
    %36 = arith.addf %34, %35 : vector<1x128xf32>
    %37 = arith.negf %36 : vector<1x128xf32>
    %38 = math.exp %37 : vector<1x128xf32>
    %cst_27 = arith.constant 1.000000e+00 : f32
    %39 = vector.broadcast %cst_27 : f32 to vector<1x128xf32>
    %40 = arith.addf %39, %38 : vector<1x128xf32>
    %41 = arith.divf %39, %40 : vector<1x128xf32>
    %42 = vector.extract_strided_slice %41 {offsets = [0, 0], sizes = [1, 64], strides = [1, 1]} : vector<1x128xf32> to vector<1x64xf32>
    %43 = vector.extract_strided_slice %41 {offsets = [0, 64], sizes = [1, 64], strides = [1, 1]} : vector<1x128xf32> to vector<1x64xf32>
    %44 = vector.extract_strided_slice %33 {offsets = [0, 128], sizes = [1, 64], strides = [1, 1]} : vector<1x192xf32> to vector<1x64xf32>
    %45 = vector.extract_strided_slice %32 {offsets = [0, 128], sizes = [1, 64], strides = [1, 1]} : vector<1x192xf32> to vector<1x64xf32>
    %46 = arith.mulf %42, %45 : vector<1x64xf32>
    %47 = arith.addf %44, %46 : vector<1x64xf32>
    %48 = math.tanh %47 : vector<1x64xf32>
    %cst_28 = arith.constant 1.000000e+00 : f32
    %49 = vector.broadcast %cst_28 : f32 to vector<1x64xf32>
    %50 = arith.subf %49, %43 : vector<1x64xf32>
    %51 = arith.mulf %50, %48 : vector<1x64xf32>
    %52 = arith.mulf %43, %30 : vector<1x64xf32>
    %53 = arith.addf %51, %52 : vector<1x64xf32>
    %c0_29 = arith.constant 0 : index
    %c0_30 = arith.constant 0 : index
    %54 = vector.load %arg19[%c0_29, %c0_30] : memref<3x64xf32, #tpu.memory_space<vmem>>, vector<1x64xf32>
    tpu.vector_store %arg19[%c0_29, %c0_30], %53 {strides = array<i32>} : memref<3x64xf32, #tpu.memory_space<vmem>>, vector<1x64xf32>,
    %cst_31 = arith.constant dense<0.000000e+00> : vector<1x192xf32>
    %55 = tpu.matmul %53, %28, %cst_31 {dimension_numbers = #tpu.dot_dimension_numbers<[1], [0], [0], [1], [0, 0, 1, 1], [], []>} : vector<1x64xf32>, vector<64x192xf32>, vector<1x192xf32> -> vector<1x192xf32>
    %56 = arith.addf %55, %29 : vector<1x192xf32>
    %57 = vector.extract_strided_slice %27 {offsets = [1, 0], sizes = [1, 192], strides = [1, 1]} : vector<3x192xf32> to vector<1x192xf32>
    %58 = vector.extract_strided_slice %57 {offsets = [0, 0], sizes = [1, 128], strides = [1, 1]} : vector<1x192xf32> to vector<1x128xf32>
    %59 = vector.extract_strided_slice %56 {offsets = [0, 0], sizes = [1, 128], strides = [1, 1]} : vector<1x192xf32> to vector<1x128xf32>
    %60 = arith.addf %58, %59 : vector<1x128xf32>
    %61 = arith.negf %60 : vector<1x128xf32>
    %62 = math.exp %61 : vector<1x128xf32>
    %cst_32 = arith.constant 1.000000e+00 : f32
    %63 = vector.broadcast %cst_32 : f32 to vector<1x128xf32>
    %64 = arith.addf %63, %62 : vector<1x128xf32>
    %65 = arith.divf %63, %64 : vector<1x128xf32>
    %66 = vector.extract_strided_slice %65 {offsets = [0, 0], sizes = [1, 64], strides = [1, 1]} : vector<1x128xf32> to vector<1x64xf32>
    %67 = vector.extract_strided_slice %65 {offsets = [0, 64], sizes = [1, 64], strides = [1, 1]} : vector<1x128xf32> to vector<1x64xf32>
    %68 = vector.extract_strided_slice %57 {offsets = [0, 128], sizes = [1, 64], strides = [1, 1]} : vector<1x192xf32> to vector<1x64xf32>
    %69 = vector.extract_strided_slice %56 {offsets = [0, 128], sizes = [1, 64], strides = [1, 1]} : vector<1x192xf32> to vector<1x64xf32>
    %70 = arith.mulf %66, %69 : vector<1x64xf32>
    %71 = arith.addf %68, %70 : vector<1x64xf32>
    %72 = math.tanh %71 : vector<1x64xf32>
    %cst_33 = arith.constant 1.000000e+00 : f32
    %73 = vector.broadcast %cst_33 : f32 to vector<1x64xf32>
    %74 = arith.subf %73, %67 : vector<1x64xf32>
    %75 = arith.mulf %74, %72 : vector<1x64xf32>
    %76 = arith.mulf %67, %53 : vector<1x64xf32>
    %77 = arith.addf %75, %76 : vector<1x64xf32>
    %c1 = arith.constant 1 : index
    %c0_34 = arith.constant 0 : index
    %78 = vector.load %arg19[%c1, %c0_34] : memref<3x64xf32, #tpu.memory_space<vmem>>, vector<1x64xf32>
    tpu.vector_store %arg19[%c1, %c0_34], %77 {strides = array<i32>} : memref<3x64xf32, #tpu.memory_space<vmem>>, vector<1x64xf32>,
    %cst_35 = arith.constant dense<0.000000e+00> : vector<1x192xf32>
    %79 = tpu.matmul %77, %28, %cst_35 {dimension_numbers = #tpu.dot_dimension_numbers<[1], [0], [0], [1], [0, 0, 1, 1], [], []>} : vector<1x64xf32>, vector<64x192xf32>, vector<1x192xf32> -> vector<1x192xf32>
    %80 = arith.addf %79, %29 : vector<1x192xf32>
    %81 = vector.extract_strided_slice %27 {offsets = [2, 0], sizes = [1, 192], strides = [1, 1]} : vector<3x192xf32> to vector<1x192xf32>
    %82 = vector.extract_strided_slice %81 {offsets = [0, 0], sizes = [1, 128], strides = [1, 1]} : vector<1x192xf32> to vector<1x128xf32>
    %83 = vector.extract_strided_slice %80 {offsets = [0, 0], sizes = [1, 128], strides = [1, 1]} : vector<1x192xf32> to vector<1x128xf32>
    %84 = arith.addf %82, %83 : vector<1x128xf32>
    %85 = arith.negf %84 : vector<1x128xf32>
    %86 = math.exp %85 : vector<1x128xf32>
    %cst_36 = arith.constant 1.000000e+00 : f32
    %87 = vector.broadcast %cst_36 : f32 to vector<1x128xf32>
    %88 = arith.addf %87, %86 : vector<1x128xf32>
    %89 = arith.divf %87, %88 : vector<1x128xf32>
    %90 = vector.extract_strided_slice %89 {offsets = [0, 0], sizes = [1, 64], strides = [1, 1]} : vector<1x128xf32> to vector<1x64xf32>
    %91 = vector.extract_strided_slice %89 {offsets = [0, 64], sizes = [1, 64], strides = [1, 1]} : vector<1x128xf32> to vector<1x64xf32>
    %92 = vector.extract_strided_slice %81 {offsets = [0, 128], sizes = [1, 64], strides = [1, 1]} : vector<1x192xf32> to vector<1x64xf32>
    %93 = vector.extract_strided_slice %80 {offsets = [0, 128], sizes = [1, 64], strides = [1, 1]} : vector<1x192xf32> to vector<1x64xf32>
    %94 = arith.mulf %90, %93 : vector<1x64xf32>
    %95 = arith.addf %92, %94 : vector<1x64xf32>
    %96 = math.tanh %95 : vector<1x64xf32>
    %cst_37 = arith.constant 1.000000e+00 : f32
    %97 = vector.broadcast %cst_37 : f32 to vector<1x64xf32>
    %98 = arith.subf %97, %91 : vector<1x64xf32>
    %99 = arith.mulf %98, %96 : vector<1x64xf32>
    %100 = arith.mulf %91, %77 : vector<1x64xf32>
    %101 = arith.addf %99, %100 : vector<1x64xf32>
    %c2 = arith.constant 2 : index
    %c0_38 = arith.constant 0 : index
    %102 = vector.load %arg19[%c2, %c0_38] : memref<3x64xf32, #tpu.memory_space<vmem>>, vector<1x64xf32>
    tpu.vector_store %arg19[%c2, %c0_38], %101 {strides = array<i32>} : memref<3x64xf32, #tpu.memory_space<vmem>>, vector<1x64xf32>,
    %c0_39 = arith.constant 0 : index
    %c0_40 = arith.constant 0 : index
    %103 = vector.load %arg19[%c0_39, %c0_40] : memref<3x64xf32, #tpu.memory_space<vmem>>, vector<3x64xf32>
    %cst_41 = arith.constant 0.000000e+00 : f32
    %104 = vector.broadcast %cst_41 : f32 to vector<3x64xf32>
    %105 = arith.maximumf %103, %104 : vector<3x64xf32>
    %c0_42 = arith.constant 0 : index
    %c0_43 = arith.constant 0 : index
    %106 = vector.load %arg11[%c0_42, %c0_43] : memref<64x16xf32, #tpu.memory_space<vmem>>, vector<64x16xf32>
    %cst_44 = arith.constant dense<0.000000e+00> : vector<3x16xf32>
    %107 = tpu.matmul %105, %106, %cst_44 {dimension_numbers = #tpu.dot_dimension_numbers<[1], [0], [0], [1], [0, 0, 1, 1], [], []>} : vector<3x64xf32>, vector<64x16xf32>, vector<3x16xf32> -> vector<3x16xf32>
    %c0_45 = arith.constant 0 : index
    %c0_46 = arith.constant 0 : index
    %108 = vector.load %arg12[%c0_45, %c0_46] : memref<1x16xf32, #tpu.memory_space<vmem>>, vector<1x16xf32>
    %109 = vector.broadcast %108 : vector<1x16xf32> to vector<3x16xf32>
    %110 = arith.addf %107, %109 : vector<3x16xf32>
    %111 = vector.extract_strided_slice %110 {offsets = [2, 0], sizes = [1, 16], strides = [1, 1]} : vector<3x16xf32> to vector<1x16xf32>
    %cst_47 = arith.constant dense<0.000000e+00> : vector<1x32xf32>
    %112 = tpu.matmul %111, %21, %cst_47 {dimension_numbers = #tpu.dot_dimension_numbers<[1], [1], [0], [0], [0, 0, 1, 0], [], []>} : vector<1x16xf32>, vector<32x16xf32>, vector<1x32xf32> -> vector<1x32xf32>
    %cst_48 = arith.constant dense<0xFF800000> : vector<1xf32>
    %113 = vector.multi_reduction <maximumf>, %112, %cst_48 [1] : vector<1x32xf32> to vector<1xf32>
    %cst_49 = arith.constant 0xFF800000 : f32
    %114 = vector.broadcast %cst_49 : f32 to vector<1xf32>
    %115 = arith.maximumf %114, %113 : vector<1xf32>
    %116 = vector.shape_cast %115 : vector<1xf32> to vector<1x1xf32>
    %117 = vector.broadcast %116 : vector<1x1xf32> to vector<1x32xf32>
    %118 = arith.subf %112, %117 : vector<1x32xf32>
    %119 = math.exp %118 : vector<1x32xf32>
    %cst_50 = arith.constant dense<0.000000e+00> : vector<1xf32>
    %120 = vector.multi_reduction <add>, %119, %cst_50 [1] : vector<1x32xf32> to vector<1xf32>
    %121 = vector.shape_cast %120 : vector<1xf32> to vector<1x1xf32>
    %122 = vector.broadcast %121 : vector<1x1xf32> to vector<1x32xf32>
    %123 = arith.divf %119, %122 : vector<1x32xf32>
    %cst_51 = arith.constant dense<0.000000e+00> : vector<1x16xf32>
    %124 = tpu.matmul %123, %21, %cst_51 {dimension_numbers = #tpu.dot_dimension_numbers<[1], [0], [0], [1], [0, 0, 1, 1], [], []>} : vector<1x32xf32>, vector<32x16xf32>, vector<1x16xf32> -> vector<1x16xf32>
    %125 = vector.extract_strided_slice %110 {offsets = [0, 0], sizes = [2, 16], strides = [1, 1]} : vector<3x16xf32> to vector<2x16xf32>
    %cst_52 = arith.constant dense<0.000000e+00> : vector<1x2xf32>
    %126 = tpu.matmul %111, %125, %cst_52 {dimension_numbers = #tpu.dot_dimension_numbers<[1], [1], [0], [0], [0, 0, 1, 0], [], []>} : vector<1x16xf32>, vector<2x16xf32>, vector<1x2xf32> -> vector<1x2xf32>
    %cst_53 = arith.constant dense<0xFF800000> : vector<1xf32>
    %127 = vector.multi_reduction <maximumf>, %126, %cst_53 [1] : vector<1x2xf32> to vector<1xf32>
    %cst_54 = arith.constant 0xFF800000 : f32
    %128 = vector.broadcast %cst_54 : f32 to vector<1xf32>
    %129 = arith.maximumf %128, %127 : vector<1xf32>
    %130 = vector.shape_cast %129 : vector<1xf32> to vector<1x1xf32>
    %131 = vector.broadcast %130 : vector<1x1xf32> to vector<1x2xf32>
    %132 = arith.subf %126, %131 : vector<1x2xf32>
    %133 = math.exp %132 : vector<1x2xf32>
    %cst_55 = arith.constant dense<0.000000e+00> : vector<1xf32>
    %134 = vector.multi_reduction <add>, %133, %cst_55 [1] : vector<1x2xf32> to vector<1xf32>
    %135 = vector.shape_cast %134 : vector<1xf32> to vector<1x1xf32>
    %136 = vector.broadcast %135 : vector<1x1xf32> to vector<1x2xf32>
    %137 = arith.divf %133, %136 : vector<1x2xf32>
    %c0_56 = arith.constant 0 : index
    %c0_57 = arith.constant 0 : index
    %138 = vector.load %arg13[%c0_56, %c0_57] : memref<2x32xf32, #tpu.memory_space<vmem>>, vector<2x32xf32>
    %cst_58 = arith.constant dense<0.000000e+00> : vector<1x32xf32>
    %139 = tpu.matmul %137, %138, %cst_58 {dimension_numbers = #tpu.dot_dimension_numbers<[1], [0], [0], [1], [0, 0, 1, 1], [], []>} : vector<1x2xf32>, vector<2x32xf32>, vector<1x32xf32> -> vector<1x32xf32>
    %cst_59 = arith.constant dense<0.000000e+00> : vector<1x16xf32>
    %140 = tpu.matmul %139, %21, %cst_59 {dimension_numbers = #tpu.dot_dimension_numbers<[1], [0], [0], [1], [0, 0, 1, 1], [], []>} : vector<1x32xf32>, vector<32x16xf32>, vector<1x16xf32> -> vector<1x16xf32>
    %c0_60 = arith.constant 0 : index
    %c0_61 = arith.constant 0 : index
    %141 = vector.load %arg14[%c0_60, %c0_61] : memref<48x32xf32, #tpu.memory_space<vmem>>, vector<48x32xf32>
    %cst_62 = arith.constant 0.000000e+00 : f32
    %142 = vector.broadcast %cst_62 : f32 to vector<1x16xf32>
    %143 = arith.maximumf %111, %142 : vector<1x16xf32>
    %144 = vector.extract_strided_slice %141 {offsets = [0, 0], sizes = [16, 32], strides = [1, 1]} : vector<48x32xf32> to vector<16x32xf32>
    %cst_63 = arith.constant dense<0.000000e+00> : vector<1x32xf32>
    %145 = tpu.matmul %143, %144, %cst_63 {dimension_numbers = #tpu.dot_dimension_numbers<[1], [0], [0], [1], [0, 0, 1, 1], [], []>} : vector<1x16xf32>, vector<16x32xf32>, vector<1x32xf32> -> vector<1x32xf32>
    %cst_64 = arith.constant 0.000000e+00 : f32
    %146 = vector.broadcast %cst_64 : f32 to vector<1x16xf32>
    %147 = arith.maximumf %124, %146 : vector<1x16xf32>
    %148 = vector.extract_strided_slice %141 {offsets = [16, 0], sizes = [16, 32], strides = [1, 1]} : vector<48x32xf32> to vector<16x32xf32>
    %cst_65 = arith.constant dense<0.000000e+00> : vector<1x32xf32>
    %149 = tpu.matmul %147, %148, %cst_65 {dimension_numbers = #tpu.dot_dimension_numbers<[1], [0], [0], [1], [0, 0, 1, 1], [], []>} : vector<1x16xf32>, vector<16x32xf32>, vector<1x32xf32> -> vector<1x32xf32>
    %150 = arith.addf %145, %149 : vector<1x32xf32>
    %cst_66 = arith.constant 0.000000e+00 : f32
    %151 = vector.broadcast %cst_66 : f32 to vector<1x16xf32>
    %152 = arith.maximumf %140, %151 : vector<1x16xf32>
    %153 = vector.extract_strided_slice %141 {offsets = [32, 0], sizes = [16, 32], strides = [1, 1]} : vector<48x32xf32> to vector<16x32xf32>
    %cst_67 = arith.constant dense<0.000000e+00> : vector<1x32xf32>
    %154 = tpu.matmul %152, %153, %cst_67 {dimension_numbers = #tpu.dot_dimension_numbers<[1], [0], [0], [1], [0, 0, 1, 1], [], []>} : vector<1x16xf32>, vector<16x32xf32>, vector<1x32xf32> -> vector<1x32xf32>
    %155 = arith.addf %150, %154 : vector<1x32xf32>
    %c0_68 = arith.constant 0 : index
    %c0_69 = arith.constant 0 : index
    %156 = vector.load %arg15[%c0_68, %c0_69] : memref<1x32xf32, #tpu.memory_space<vmem>>, vector<1x32xf32>
    %157 = arith.addf %155, %156 : vector<1x32xf32>
    %cst_70 = arith.constant 0.000000e+00 : f32
    %158 = vector.broadcast %cst_70 : f32 to vector<1x32xf32>
    %159 = arith.maximumf %157, %158 : vector<1x32xf32>
    %c0_71 = arith.constant 0 : index
    %c0_72 = arith.constant 0 : index
    %160 = vector.load %arg16[%c0_71, %c0_72] : memref<32x128xf32, #tpu.memory_space<vmem>>, vector<32x128xf32>
    %cst_73 = arith.constant dense<0.000000e+00> : vector<1x128xf32>
    %161 = tpu.matmul %159, %160, %cst_73 {dimension_numbers = #tpu.dot_dimension_numbers<[1], [0], [0], [1], [0, 0, 1, 1], [], []>} : vector<1x32xf32>, vector<32x128xf32>, vector<1x128xf32> -> vector<1x128xf32>
    %c0_74 = arith.constant 0 : index
    %c0_75 = arith.constant 0 : index
    %162 = vector.load %arg17[%c0_74, %c0_75] : memref<1x128xf32, #tpu.memory_space<vmem>>, vector<1x128xf32>
    %163 = arith.addf %161, %162 : vector<1x128xf32>
    %c0_76 = arith.constant 0 : index
    %c0_77 = arith.constant 0 : index
    %164 = vector.load %arg18[%c0_76, %c0_77] : memref<1x128xf32, #tpu.memory_space<vmem>>, vector<1x128xf32>
    tpu.vector_store %arg18[%c0_76, %c0_77], %163 {strides = array<i32>} : memref<1x128xf32, #tpu.memory_space<vmem>>, vector<1x128xf32>,
    return
  }
}

</mosaic_0001>

<llo_original>
// kernel: tpu_custom_call.1
$region0: #{tpu_custom_call.1}
  #allocation0 [shape = 'u32[]', space=smem, size = 0x4, offset = 0x4, fixed_abs, tag = 'smem constant byte address 0x4 - core index']
  #allocation1 [shape = 'u32[144,128]{1,0:T(1,128)}', space=vmem, size = 0x12000, scoped, tag = 'internal scratch']
  #allocation2 [shape = 'f32[3,64]{1,0:T(4,128)}', space=vmem, size = 0x800, scoped, tag = 'scratch operand']
  #allocation3 [shape = 'f32[1]{0:T(128)S(6)}', space=smem, size = 0x200, scoped, tag = 'scoped memory for tpu_custom_call.1']
  %s0 = inlined_call_operand.hbm [shape: f32[3,32], index: 0, kind: input, shape index: {}]
  %s1 = inlined_call_operand.vmem [shape: f32[32,192], index: 1, kind: input, shape index: {}]
  %s2 = inlined_call_operand.vmem [shape: f32[64,192], index: 2, kind: input, shape index: {}]
  %s3 = inlined_call_operand.vmem [shape: f32[1,192], index: 3, kind: input, shape index: {}]
  %s4 = inlined_call_operand.hbm [shape: f32[1,192], index: 4, kind: input, shape index: {}]
  %s5 = inlined_call_operand.vmem [shape: f32[64,64], index: 5, kind: input, shape index: {}]
  %s6 = inlined_call_operand.vmem [shape: f32[64,16], index: 6, kind: input, shape index: {}]
  %s7 = inlined_call_operand.vmem [shape: f32[64,16], index: 7, kind: input, shape index: {}]
  %s8 = inlined_call_operand.hbm [shape: f32[16,32], index: 8, kind: input, shape index: {}]
  %s9 = inlined_call_operand.vmem [shape: f32[1,32], index: 9, kind: input, shape index: {}]
  %s10 = inlined_call_operand.<no memory space> [shape: f32[1], index: 10, kind: input, shape index: {}]
  %s11 = inlined_call_operand.vmem [shape: f32[64,16], index: 11, kind: input, shape index: {}]
  %s12 = inlined_call_operand.hbm [shape: f32[1,16], index: 12, kind: input, shape index: {}]
  %s13 = inlined_call_operand.vmem [shape: f32[2,32], index: 13, kind: input, shape index: {}]
  %s14 = inlined_call_operand.vmem [shape: f32[48,32], index: 14, kind: input, shape index: {}]
  %s15 = inlined_call_operand.vmem [shape: f32[1,32], index: 15, kind: input, shape index: {}]
  %s16 = inlined_call_operand.vmem [shape: f32[32,128], index: 16, kind: input, shape index: {}]
  %s17 = inlined_call_operand.vmem [shape: f32[1,128], index: 17, kind: input, shape index: {}]
  %s18 = inlined_call_operand.hbm [shape: f32[1,128], index: 18, kind: output, shape index: {}]
  %s19 = sld [smem:[#allocation0]]
  $region98: #{tpu_custom_call.1} parent=0
    _
  %s21 = ssub.s32 1, %s19
  %s22 = scalar_select 0, %s21, %s19
  %23 = sst [smem:[#allocation3]] %s10
  $region1: #{tpu_custom_call.1} parent=0
    #allocation4 [shape = 'u8[2048]{0}', space=vmem, size = 0x800, scoped, tag = 'input window, operand 0, single buffered']
    #allocation5 [shape = 's32[1]{0}', space=sflag, size = 0x4, scoped, tag = 'scoped memory for tpu_custom_call.1']
    #allocation6 [shape = 's32[1]{0}', space=sflag, size = 0x4, scoped, tag = 'scoped memory for tpu_custom_call.1']
    #allocation7 [shape = 'u8[1024]{0}', space=vmem, size = 0x400, scoped, tag = 'input window, operand 4, single buffered']
    #allocation8 [shape = 's32[1]{0}', space=sflag, size = 0x4, scoped, tag = 'scoped memory for tpu_custom_call.1']
    #allocation9 [shape = 'u8[8192]{0}', space=vmem, size = 0x2000, scoped, tag = 'input window, operand 8, single buffered']
    #allocation10 [shape = 'u8[512]{0}', space=vmem, size = 0x400, scoped, tag = 'input window, operand 12, single buffered']
    #allocation11 [shape = 's32[1]{0}', space=sflag, size = 0x4, scoped, tag = 'scoped memory for tpu_custom_call.1']
    #allocation12 [shape = 'u8[512]{0}', space=vmem, size = 0x400, scoped, tag = 'output window, operand 0, single buffered']
    %24 = vsyncpa [#allocation5], 0
    %25 = vsyncpa [#allocation8], 0
    %26 = vsyncpa [#allocation11], 0
    %27 = vsyncpa [#allocation6], 0
    // Predicated region
    $region2: #{tpu_custom_call.1} parent=1 // pred_check
      _
    $region3: #{tpu_custom_call.1} parent=1 // pred_check_branch
      %29 = sbr.rel (0) target = $region5
    $region4: #{tpu_custom_call.1} parent=1 // pred_region
      %s31 = ssub.s32 64, 64
      %32 = vsyncadd [#allocation5], %s31
      %s34 = sshll.u32 [#allocation4], 4
      %s35 = int_to_ptr.vmem [resolvable:$true] %s34
      %37 = dma.hbm_to_vmem [thread:$0]  %s0, 64, %s35, [#allocation5]
    $region5: #{tpu_custom_call.1} parent=1 // pred_fallthru
      _
    // Predicated region
    $region6: #{tpu_custom_call.1} parent=1 // pred_check
      _
    $region7: #{tpu_custom_call.1} parent=1 // pred_check_branch
      %39 = sbr.rel (0) target = $region9
    $region8: #{tpu_custom_call.1} parent=1 // pred_region
      _
    $region9: #{tpu_custom_call.1} parent=1 // pred_fallthru
      _
    // Predicated region
    $region10: #{tpu_custom_call.1} parent=1 // pred_check
      _
    $region11: #{tpu_custom_call.1} parent=1 // pred_check_branch
      %41 = sbr.rel (0) target = $region13
    $region12: #{tpu_custom_call.1} parent=1 // pred_region
      _
    $region13: #{tpu_custom_call.1} parent=1 // pred_fallthru
      _
    // Predicated region
    $region14: #{tpu_custom_call.1} parent=1 // pred_check
      _
    $region15: #{tpu_custom_call.1} parent=1 // pred_check_branch
      %43 = sbr.rel (0) target = $region17
    $region16: #{tpu_custom_call.1} parent=1 // pred_region
      _
    $region17: #{tpu_custom_call.1} parent=1 // pred_fallthru
      _
    // Predicated region
    $region18: #{tpu_custom_call.1} parent=1 // pred_check
      _
    $region19: #{tpu_custom_call.1} parent=1 // pred_check_branch
      %45 = sbr.rel (0) target = $region21
    $region20: #{tpu_custom_call.1} parent=1 // pred_region
      %s47 = ssub.s32 32, 32
      %48 = vsyncadd [#allocation8], %s47
      %s50 = sshll.u32 [#allocation7], 4
      %s51 = int_to_ptr.vmem [resolvable:$true] %s50
      %53 = dma.hbm_to_vmem [thread:$0]  %s4, 32, %s51, [#allocation8]
    $region21: #{tpu_custom_call.1} parent=1 // pred_fallthru
      _
    // Predicated region
    $region22: #{tpu_custom_call.1} parent=1 // pred_check
      _
    $region23: #{tpu_custom_call.1} parent=1 // pred_check_branch
      %55 = sbr.rel (0) target = $region25
    $region24: #{tpu_custom_call.1} parent=1 // pred_region
      _
    $region25: #{tpu_custom_call.1} parent=1 // pred_fallthru
      _
    // Predicated region
    $region26: #{tpu_custom_call.1} parent=1 // pred_check
      _
    $region27: #{tpu_custom_call.1} parent=1 // pred_check_branch
      %57 = sbr.rel (0) target = $region29
    $region28: #{tpu_custom_call.1} parent=1 // pred_region
      _
    $region29: #{tpu_custom_call.1} parent=1 // pred_fallthru
      _
    // Predicated region
    $region30: #{tpu_custom_call.1} parent=1 // pred_check
      _
    $region31: #{tpu_custom_call.1} parent=1 // pred_check_branch
      %59 = sbr.rel (0) target = $region33
    $region32: #{tpu_custom_call.1} parent=1 // pred_region
      _
    $region33: #{tpu_custom_call.1} parent=1 // pred_fallthru
      _
    // Predicated region
    $region34: #{tpu_custom_call.1} parent=1 // pred_check
      _
    $region35: #{tpu_custom_call.1} parent=1 // pred_check_branch
      %61 = sbr.rel (0) target = $region37
    $region36: #{tpu_custom_call.1} parent=1 // pred_region
      %s63 = ssub.s32 256, 256
      %64 = vsyncadd [#allocation8], %s63
      %s65 = sshll.u32 [#allocation9], 4
      %s66 = int_to_ptr.vmem [resolvable:$true] %s65
      %71 = dma.hbm_to_vmem [thread:$0]  %s8, 256, %s66, [#allocation8], 128, 128, 8
    $region37: #{tpu_custom_call.1} parent=1 // pred_fallthru
      _
    // Predicated region
    $region38: #{tpu_custom_call.1} parent=1 // pred_check
      _
    $region39: #{tpu_custom_call.1} parent=1 // pred_check_branch
      %73 = sbr.rel (0) target = $region41
    $region40: #{tpu_custom_call.1} parent=1 // pred_region
      _
    $region41: #{tpu_custom_call.1} parent=1 // pred_fallthru
      _
    // Predicated region
    $region42: #{tpu_custom_call.1} parent=1 // pred_check
      _
    $region43: #{tpu_custom_call.1} parent=1 // pred_check_branch
      %75 = sbr.rel (0) target = $region45
    $region44: #{tpu_custom_call.1} parent=1 // pred_region
      _
    $region45: #{tpu_custom_call.1} parent=1 // pred_fallthru
      _
    // Predicated region
    $region46: #{tpu_custom_call.1} parent=1 // pred_check
      _
    $region47: #{tpu_custom_call.1} parent=1 // pred_check_branch
      %77 = sbr.rel (0) target = $region49
    $region48: #{tpu_custom_call.1} parent=1 // pred_region
      _
    $region49: #{tpu_custom_call.1} parent=1 // pred_fallthru
      _
    // Predicated region
    $region50: #{tpu_custom_call.1} parent=1 // pred_check
      _
    $region51: #{tpu_custom_call.1} parent=1 // pred_check_branch
      %79 = sbr.rel (0) target = $region53
    $region52: #{tpu_custom_call.1} parent=1 // pred_region
      %s81 = ssub.s32 16, 16
      %82 = vsyncadd [#allocation11], %s81
      %s84 = sshll.u32 [#allocation10], 4
      %s85 = int_to_ptr.vmem [resolvable:$true] %s84
      %87 = dma.hbm_to_vmem [thread:$0]  %s12, 16, %s85, [#allocation11]
    $region53: #{tpu_custom_call.1} parent=1 // pred_fallthru
      _
    // Predicated region
    $region54: #{tpu_custom_call.1} parent=1 // pred_check
      _
    $region55: #{tpu_custom_call.1} parent=1 // pred_check_branch
      %89 = sbr.rel (0) target = $region57
    $region56: #{tpu_custom_call.1} parent=1 // pred_region
      _
    $region57: #{tpu_custom_call.1} parent=1 // pred_fallthru
      _
    // Predicated region
    $region58: #{tpu_custom_call.1} parent=1 // pred_check
      _
    $region59: #{tpu_custom_call.1} parent=1 // pred_check_branch
      %91 = sbr.rel (0) target = $region61
    $region60: #{tpu_custom_call.1} parent=1 // pred_region
      _
    $region61: #{tpu_custom_call.1} parent=1 // pred_fallthru
      _
    // Predicated region
    $region62: #{tpu_custom_call.1} parent=1 // pred_check
      _
    $region63: #{tpu_custom_call.1} parent=1 // pred_check_branch
      %93 = sbr.rel (0) target = $region65
    $region64: #{tpu_custom_call.1} parent=1 // pred_region
      _
    $region65: #{tpu_custom_call.1} parent=1 // pred_fallthru
      _
    // Predicated region
    $region66: #{tpu_custom_call.1} parent=1 // pred_check
      _
    $region67: #{tpu_custom_call.1} parent=1 // pred_check_branch
      %95 = sbr.rel (0) target = $region69
    $region68: #{tpu_custom_call.1} parent=1 // pred_region
      _
    $region69: #{tpu_custom_call.1} parent=1 // pred_fallthru
      _
    // Predicated region
    $region70: #{tpu_custom_call.1} parent=1 // pred_check
      _
    $region71: #{tpu_custom_call.1} parent=1 // pred_check_branch
      %97 = sbr.rel (0) target = $region73
    $region72: #{tpu_custom_call.1} parent=1 // pred_region
      _
    $region73: #{tpu_custom_call.1} parent=1 // pred_fallthru
      _
    // Predicated region
    $region74: #{tpu_custom_call.1} parent=1 // pred_check
      _
    $region75: #{tpu_custom_call.1} parent=1 // pred_check_branch
      %99 = sbr.rel (0) target = $region77
    $region76: #{tpu_custom_call.1} parent=1 // pred_region
      %100 = dma.done [#allocation5], 64
    $region77: #{tpu_custom_call.1} parent=1 // pred_fallthru
      _
    // Predicated region
    $region78: #{tpu_custom_call.1} parent=1 // pred_check
      _
    $region79: #{tpu_custom_call.1} parent=1 // pred_check_branch
      %102 = sbr.rel (0) target = $region81
    $region80: #{tpu_custom_call.1} parent=1 // pred_region
      %103 = dma.done [#allocation8], 32
    $region81: #{tpu_custom_call.1} parent=1 // pred_fallthru
      _
    // Predicated region
    $region82: #{tpu_custom_call.1} parent=1 // pred_check
      _
    $region83: #{tpu_custom_call.1} parent=1 // pred_check_branch
      %105 = sbr.rel (0) target = $region85
    $region84: #{tpu_custom_call.1} parent=1 // pred_region
      %106 = dma.done [#allocation8], 256
    $region85: #{tpu_custom_call.1} parent=1 // pred_fallthru
      _
    // Predicated region
    $region86: #{tpu_custom_call.1} parent=1 // pred_check
      _
    $region87: #{tpu_custom_call.1} parent=1 // pred_check_branch
      %108 = sbr.rel (0) target = $region89
    $region88: #{tpu_custom_call.1} parent=1 // pred_region
      %109 = dma.done [#allocation11], 16
    $region89: #{tpu_custom_call.1} parent=1 // pred_fallthru
      _
    %v110 = vld [vmem:[%s5] sm:$0xff]
    %v111 = vld [vmem:[%s5 + $0x8] sm:$0xff]
    %v112 = vld [vmem:[%s5 + $0x10] sm:$0xff]
    %v113 = vld [vmem:[%s5 + $0x18] sm:$0xff]
    %v114 = vld [vmem:[%s5 + $0x20] sm:$0xff]
    %v115 = vld [vmem:[%s5 + $0x28] sm:$0xff]
    %v116 = vld [vmem:[%s5 + $0x30] sm:$0xff]
    %v117 = vld [vmem:[%s5 + $0x38] sm:$0xff]
    %v118 = vld [vmem:[%s6] sm:$0xff]
    %v119 = vld [vmem:[%s6 + $0x8] sm:$0xff]
    %v120 = vld [vmem:[%s6 + $0x10] sm:$0xff]
    %v121 = vld [vmem:[%s6 + $0x18] sm:$0xff]
    %v122 = vld [vmem:[%s6 + $0x20] sm:$0xff]
    %v123 = vld [vmem:[%s6 + $0x28] sm:$0xff]
    %v124 = vld [vmem:[%s6 + $0x30] sm:$0xff]
    %v125 = vld [vmem:[%s6 + $0x38] sm:$0xff]
    %v126 = vld [vmem:[%s7] sm:$0xff]
    %v127 = vld [vmem:[%s7 + $0x8] sm:$0xff]
    %v128 = vld [vmem:[%s7 + $0x10] sm:$0xff]
    %v129 = vld [vmem:[%s7 + $0x18] sm:$0xff]
    %v130 = vld [vmem:[%s7 + $0x20] sm:$0xff]
    %v131 = vld [vmem:[%s7 + $0x28] sm:$0xff]
    %v132 = vld [vmem:[%s7 + $0x30] sm:$0xff]
    %v133 = vld [vmem:[%s7 + $0x38] sm:$0xff]
    %vm134 = vcmask 523264
    %v136 = vsel %vm134, %v110, 0
    %v139 = vsel %vm134, %v111, 0
    %v142 = vsel %vm134, %v112, 0
    %v145 = vsel %vm134, %v113, 0
    %v148 = vsel %vm134, %v114, 0
    %v151 = vsel %vm134, %v115, 0
    %v154 = vsel %vm134, %v116, 0
    %v157 = vsel %vm134, %v117, 0
    %159 = vmatprep.subr.mxu0 0.0
    %160 = vmatpush1.msra.mxu0 %v118
    %161 = vmatprep.subr.mxu0 0.0
    %162 = vmatpush1.msra.mxu0 %v119
    %163 = vmatprep.subr.mxu0 0.0
    %164 = vmatpush1.msra.mxu0 %v120
    %165 = vmatprep.subr.mxu0 0.0
    %166 = vmatpush1.msra.mxu0 %v121
    %167 = vmatprep.subr.mxu0 0.0
    %168 = vmatpush1.msra.mxu0 %v122
    %169 = vmatprep.subr.mxu0 0.0
    %170 = vmatpush1.msra.mxu0 %v123
    %171 = vmatprep.subr.mxu0 0.0
    %172 = vmatpush1.msra.mxu0 %v124
    %173 = vmatprep.subr.mxu0 0.0
    %174 = vmatpush1.msra.mxu0 %v125
    %175 = vmatprep.subr.mxu0 0.0
    %176 = vmatpush1.msra.mxu0 0.0
    %177 = vmatprep.subr.mxu0 0.0
    %178 = vmatpush1.msra.mxu0 0.0
    %179 = vmatprep.subr.mxu0 0.0
    %180 = vmatpush1.msra.mxu0 0.0
    %181 = vmatprep.subr.mxu0 0.0
    %182 = vmatpush1.msra.mxu0 0.0
    %183 = vmatprep.subr.mxu0 0.0
    %184 = vmatpush1.msra.mxu0 0.0
    %185 = vmatprep.subr.mxu0 0.0
    %186 = vmatpush1.msra.mxu0 0.0
    %187 = vmatprep.subr.mxu0 0.0
    %188 = vmatpush1.msra.mxu0 0.0
    %189 = vmatprep.subr.mxu0 0.0
    %190 = vmatpush1.msra.mxu0 0.0
    %191 = vmatprep.subr.mxu0 0.0
    %192 = vmatpush1.msra.mxu0 0.0
    %193 = vmatprep.subr.mxu0 0.0
    %194 = vmatpush1.msra.mxu0 0.0
    %195 = vmatprep.subr.mxu0 0.0
    %196 = vmatpush1.msra.mxu0 0.0
    %197 = vmatprep.subr.mxu0 0.0
    %198 = vmatpush1.msra.mxu0 0.0
    %199 = vmatprep.subr.mxu0 0.0
    %200 = vmatpush1.msra.mxu0 0.0
    %201 = vmatprep.subr.mxu0 0.0
    %202 = vmatpush1.msra.mxu0 0.0
    %203 = vmatprep.subr.mxu0 0.0
    %204 = vmatpush1.msra.mxu0 0.0
    %205 = vmatprep.subr.mxu0 0.0
    %206 = vmatpush1.msra.mxu0 0.0
    %207 = vmatprep.subr.mxu0 0.0
    %208 = vmatpush1.msra.mxu0 0.0
    %209 = vmatprep.subr.mxu0 0.0
    %210 = vmatpush1.msra.mxu0 0.0
    %211 = vmatprep.subr.mxu0 0.0
    %212 = vmatpush1.msra.mxu0 0.0
    %213 = vmatprep.subr.mxu0 0.0
    %214 = vmatpush1.msra.mxu0 0.0
    %215 = vmatprep.subr.mxu0 0.0
    %216 = vmatpush1.msra.mxu0 0.0
    %217 = vmatprep.subr.mxu0 0.0
    %218 = vmatpush1.msra.mxu0 0.0
    %219 = vmatprep.subr.mxu0 0.0
    %220 = vmatpush1.msra.mxu0 0.0
    %221 = vmatprep.subr.mxu0 0.0
    %222 = vmatpush1.msra.mxu0 0.0
    %223 = vmatprep.mubr.f32.mxu0 0.0
    %224 = vmatmul.mubr.f32.gmra.mrb[0].mxu0 %v136
    %v225 = vpop.f32.mrb[0].mxu0
    %v226 = vadd.f32 %v126, %v225
    %v227 = vpop.f32.mrb[0].mxu0
    %228 = vmatprep.mubr.f32.mxu0 0.0
    %229 = vmatmul.mubr.f32.gmra.mrb[0].mxu0 %v139
    %v230 = vpop.f32.mrb[0].mxu0
    %v231 = vadd.f32 %v127, %v230
    %v232 = vpop.f32.mrb[0].mxu0
    %233 = vmatprep.mubr.f32.mxu0 0.0
    %234 = vmatmul.mubr.f32.gmra.mrb[0].mxu0 %v142
    %v235 = vpop.f32.mrb[0].mxu0
    %v236 = vadd.f32 %v128, %v235
    %v237 = vpop.f32.mrb[0].mxu0
    %238 = vmatprep.mubr.f32.mxu0 0.0
    %239 = vmatmul.mubr.f32.gmra.mrb[0].mxu0 %v145
    %v240 = vpop.f32.mrb[0].mxu0
    %v241 = vadd.f32 %v129, %v240
    %v242 = vpop.f32.mrb[0].mxu0
    %243 = vmatprep.mubr.f32.mxu0 0.0
    %244 = vmatmul.mubr.f32.gmra.mrb[0].mxu0 %v148
    %v245 = vpop.f32.mrb[0].mxu0
    %v246 = vadd.f32 %v130, %v245
    %v247 = vpop.f32.mrb[0].mxu0
    %248 = vmatprep.mubr.f32.mxu0 0.0
    %249 = vmatmul.mubr.f32.gmra.mrb[0].mxu0 %v151
    %v250 = vpop.f32.mrb[0].mxu0
    %v251 = vadd.f32 %v131, %v250
    %v252 = vpop.f32.mrb[0].mxu0
    %253 = vmatprep.mubr.f32.mxu0 0.0
    %254 = vmatmul.mubr.f32.gmra.mrb[0].mxu0 %v154
    %v255 = vpop.f32.mrb[0].mxu0
    %v256 = vadd.f32 %v132, %v255
    %v257 = vpop.f32.mrb[0].mxu0
    %258 = vmatprep.mubr.f32.mxu0 0.0
    %259 = vmatmul.mubr.f32.gmra.mrb[0].mxu0 %v157
    %v260 = vpop.f32.mrb[0].mxu0
    %v261 = vadd.f32 %v133, %v260
    %v262 = vpop.f32.mrb[0].mxu0
    %263 = vdwg.mxu0
    %v264 = vmax.f32 %v226, 0.0
    %v265 = vmax.f32 %v231, 0.0
    %v266 = vmax.f32 %v236, 0.0
    %v267 = vmax.f32 %v241, 0.0
    %v268 = vmax.f32 %v246, 0.0
    %v269 = vmax.f32 %v251, 0.0
    %v270 = vmax.f32 %v256, 0.0
    %v271 = vmax.f32 %v261, 0.0
    %v272 = vld [vmem:[#allocation9] sm:$0xff]
    %v273 = vld [vmem:[#allocation9 + $0x8] sm:$0xff]
    %vm274 = vcmask 130048
    %v276 = vsel %vm274, %v264, 0
    %v279 = vsel %vm274, %v265, 0
    %v282 = vsel %vm274, %v266, 0
    %v285 = vsel %vm274, %v267, 0
    %v288 = vsel %vm274, %v268, 0
    %v291 = vsel %vm274, %v269, 0
    %v294 = vsel %vm274, %v270, 0
    %v297 = vsel %vm274, %v271, 0
    %299 = vmatprep.subr.mxu0 0.0
    %300 = vmatpush1.msra.mxu0 %v272
    %301 = vmatprep.subr.mxu0 0.0
    %302 = vmatpush1.msra.mxu0 %v273
    %303 = vmatprep.subr.mxu0 0.0
    %304 = vmatpush1.msra.mxu0 0.0
    %305 = vmatprep.subr.mxu0 0.0
    %306 = vmatpush1.msra.mxu0 0.0
    %307 = vmatprep.subr.mxu0 0.0
    %308 = vmatpush1.msra.mxu0 0.0
    %309 = vmatprep.subr.mxu0 0.0
    %310 = vmatpush1.msra.mxu0 0.0
    %311 = vmatprep.subr.mxu0 0.0
    %312 = vmatpush1.msra.mxu0 0.0
    %313 = vmatprep.subr.mxu0 0.0
    %314 = vmatpush1.msra.mxu0 0.0
    %315 = vmatprep.subr.mxu0 0.0
    %316 = vmatpush1.msra.mxu0 0.0
    %317 = vmatprep.subr.mxu0 0.0
    %318 = vmatpush1.msra.mxu0 0.0
    %319 = vmatprep.subr.mxu0 0.0
    %320 = vmatpush1.msra.mxu0 0.0
    %321 = vmatprep.subr.mxu0 0.0
    %322 = vmatpush1.msra.mxu0 0.0
    %323 = vmatprep.subr.mxu0 0.0
    %324 = vmatpush1.msra.mxu0 0.0
    %325 = vmatprep.subr.mxu0 0.0
    %326 = vmatpush1.msra.mxu0 0.0
    %327 = vmatprep.subr.mxu0 0.0
    %328 = vmatpush1.msra.mxu0 0.0
    %329 = vmatprep.subr.mxu0 0.0
    %330 = vmatpush1.msra.mxu0 0.0
    %331 = vmatprep.subr.mxu0 0.0
    %332 = vmatpush1.msra.mxu0 0.0
    %333 = vmatprep.subr.mxu0 0.0
    %334 = vmatpush1.msra.mxu0 0.0
    %335 = vmatprep.subr.mxu0 0.0
    %336 = vmatpush1.msra.mxu0 0.0
    %337 = vmatprep.subr.mxu0 0.0
    %338 = vmatpush1.msra.mxu0 0.0
    %339 = vmatprep.subr.mxu0 0.0
    %340 = vmatpush1.msra.mxu0 0.0
    %341 = vmatprep.subr.mxu0 0.0
    %342 = vmatpush1.msra.mxu0 0.0
    %343 = vmatprep.subr.mxu0 0.0
    %344 = vmatpush1.msra.mxu0 0.0
    %345 = vmatprep.subr.mxu0 0.0
    %346 = vmatpush1.msra.mxu0 0.0
    %347 = vmatprep.subr.mxu0 0.0
    %348 = vmatpush1.msra.mxu0 0.0
    %349 = vmatprep.subr.mxu0 0.0
    %350 = vmatpush1.msra.mxu0 0.0
    %351 = vmatprep.subr.mxu0 0.0
    %352 = vmatpush1.msra.mxu0 0.0
    %353 = vmatprep.subr.mxu0 0.0
    %354 = vmatpush1.msra.mxu0 0.0
    %355 = vmatprep.subr.mxu0 0.0
    %356 = vmatpush1.msra.mxu0 0.0
    %357 = vmatprep.subr.mxu0 0.0
    %358 = vmatpush1.msra.mxu0 0.0
    %359 = vmatprep.subr.mxu0 0.0
    %360 = vmatpush1.msra.mxu0 0.0
    %361 = vmatprep.subr.mxu0 0.0
    %362 = vmatpush1.msra.mxu0 0.0
    %363 = vmatprep.mubr.f32.mxu0 0.0
    %364 = vmatmul.mubr.f32.gmra.mrb[0].mxu0 %v276
    %v365 = vpop.f32.mrb[0].mxu0
    %v366 = vadd.f32 0.0, %v365
    %v367 = vpop.f32.mrb[0].mxu0
    %368 = vmatprep.mubr.f32.mxu0 0.0
    %369 = vmatmul.mubr.f32.gmra.mrb[0].mxu0 %v279
    %v370 = vpop.f32.mrb[0].mxu0
    %v371 = vadd.f32 0.0, %v370
    %v372 = vpop.f32.mrb[0].mxu0
    %373 = vmatprep.mubr.f32.mxu0 0.0
    %374 = vmatmul.mubr.f32.gmra.mrb[0].mxu0 %v282
    %v375 = vpop.f32.mrb[0].mxu0
    %v376 = vadd.f32 0.0, %v375
    %v377 = vpop.f32.mrb[0].mxu0
    %378 = vmatprep.mubr.f32.mxu0 0.0
    %379 = vmatmul.mubr.f32.gmra.mrb[0].mxu0 %v285
    %v380 = vpop.f32.mrb[0].mxu0
    %v381 = vadd.f32 0.0, %v380
    %v382 = vpop.f32.mrb[0].mxu0
    %383 = vmatprep.mubr.f32.mxu0 0.0
    %384 = vmatmul.mubr.f32.gmra.mrb[0].mxu0 %v288
    %v385 = vpop.f32.mrb[0].mxu0
    %v386 = vadd.f32 0.0, %v385
    %v387 = vpop.f32.mrb[0].mxu0
    %388 = vmatprep.mubr.f32.mxu0 0.0
    %389 = vmatmul.mubr.f32.gmra.mrb[0].mxu0 %v291
    %v390 = vpop.f32.mrb[0].mxu0
    %v391 = vadd.f32 0.0, %v390
    %v392 = vpop.f32.mrb[0].mxu0
    %393 = vmatprep.mubr.f32.mxu0 0.0
    %394 = vmatmul.mubr.f32.gmra.mrb[0].mxu0 %v294
    %v395 = vpop.f32.mrb[0].mxu0
    %v396 = vadd.f32 0.0, %v395
    %v397 = vpop.f32.mrb[0].mxu0
    %398 = vmatprep.mubr.f32.mxu0 0.0
    %399 = vmatmul.mubr.f32.gmra.mrb[0].mxu0 %v297
    %v400 = vpop.f32.mrb[0].mxu0
    %v401 = vadd.f32 0.0, %v400
    %v402 = vpop.f32.mrb[0].mxu0
    %403 = vdwg.mxu0
    %404 = vmatprep.subr.mxu0 0.0
    %405 = vmatpush1.msra.mxu0 %v366
    %406 = vmatprep.subr.mxu0 0.0
    %407 = vmatpush1.msra.mxu0 %v371
    %408 = vmatprep.subr.mxu0 0.0
    %409 = vmatpush1.msra.mxu0 %v376
    %410 = vmatprep.subr.mxu0 0.0
    %411 = vmatpush1.msra.mxu0 %v381
    %412 = vmatprep.subr.mxu0 0.0
    %413 = vmatpush1.msra.mxu0 %v386
    %414 = vmatprep.subr.mxu0 0.0
    %415 = vmatpush1.msra.mxu0 %v391
    %416 = vmatprep.subr.mxu0 0.0
    %417 = vmatpush1.msra.mxu0 %v396
    %418 = vmatprep.subr.mxu0 0.0
    %419 = vmatpush1.msra.mxu0 %v401
    %420 = vmatprep.subr.mxu0 0.0
    %421 = vmatpush1.msra.mxu0 0.0
    %422 = vmatprep.subr.mxu0 0.0
    %423 = vmatpush1.msra.mxu0 0.0
    %424 = vmatprep.subr.mxu0 0.0
    %425 = vmatpush1.msra.mxu0 0.0
    %426 = vmatprep.subr.mxu0 0.0
    %427 = vmatpush1.msra.mxu0 0.0
    %428 = vmatprep.subr.mxu0 0.0
    %429 = vmatpush1.msra.mxu0 0.0
    %430 = vmatprep.subr.mxu0 0.0
    %431 = vmatpush1.msra.mxu0 0.0
    %432 = vmatprep.subr.mxu0 0.0
    %433 = vmatpush1.msra.mxu0 0.0
    %434 = vmatprep.subr.mxu0 0.0
    %435 = vmatpush1.msra.mxu0 0.0
    %436 = vmatprep.subr.mxu0 0.0
    %437 = vmatpush1.msra.mxu0 0.0
    %438 = vmatprep.subr.mxu0 0.0
    %439 = vmatpush1.msra.mxu0 0.0
    %440 = vmatprep.subr.mxu0 0.0
    %441 = vmatpush1.msra.mxu0 0.0
    %442 = vmatprep.subr.mxu0 0.0
    %443 = vmatpush1.msra.mxu0 0.0
    %444 = vmatprep.subr.mxu0 0.0
    %445 = vmatpush1.msra.mxu0 0.0
    %446 = vmatprep.subr.mxu0 0.0
    %447 = vmatpush1.msra.mxu0 0.0
    %448 = vmatprep.subr.mxu0 0.0
    %449 = vmatpush1.msra.mxu0 0.0
    %450 = vmatprep.subr.mxu0 0.0
    %451 = vmatpush1.msra.mxu0 0.0
    %452 = vmatprep.subr.mxu0 0.0
    %453 = vmatpush1.msra.mxu0 0.0
    %454 = vmatprep.subr.mxu0 0.0
    %455 = vmatpush1.msra.mxu0 0.0
    %456 = vmatprep.subr.mxu0 0.0
    %457 = vmatpush1.msra.mxu0 0.0
    %458 = vmatprep.subr.mxu0 0.0
    %459 = vmatpush1.msra.mxu0 0.0
    %460 = vmatprep.subr.mxu0 0.0
    %461 = vmatpush1.msra.mxu0 0.0
    %462 = vmatprep.subr.mxu0 0.0
    %463 = vmatpush1.msra.mxu0 0.0
    %464 = vmatprep.subr.mxu0 0.0
    %465 = vmatpush1.msra.mxu0 0.0
    %466 = vmatprep.subr.mxu0 0.0
    %467 = vmatpush1.msra.mxu0 0.0
    %468 = vmatprep.mubr.f32.mxu0 0.0
    %469 = vmatmul.mubr.f32.gmra.mrb[0].mxu0 %v136
    %v470 = vpop.f32.mrb[0].mxu0
    %v471 = vadd.f32 0.0, %v470
    %v472 = vpop.f32.mrb[0].mxu0
    %473 = vmatprep.mubr.f32.mxu0 0.0
    %474 = vmatmul.mubr.f32.gmra.mrb[0].mxu0 %v139
    %v475 = vpop.f32.mrb[0].mxu0
    %v476 = vadd.f32 0.0, %v475
    %v477 = vpop.f32.mrb[0].mxu0
    %478 = vmatprep.mubr.f32.mxu0 0.0
    %479 = vmatmul.mubr.f32.gmra.mrb[0].mxu0 %v142
    %v480 = vpop.f32.mrb[0].mxu0
    %v481 = vadd.f32 0.0, %v480
    %v482 = vpop.f32.mrb[0].mxu0
    %483 = vmatprep.mubr.f32.mxu0 0.0
    %484 = vmatmul.mubr.f32.gmra.mrb[0].mxu0 %v145
    %v485 = vpop.f32.mrb[0].mxu0
    %v486 = vadd.f32 0.0, %v485
    %v487 = vpop.f32.mrb[0].mxu0
    %488 = vmatprep.mubr.f32.mxu0 0.0
    %489 = vmatmul.mubr.f32.gmra.mrb[0].mxu0 %v148
    %v490 = vpop.f32.mrb[0].mxu0
    %v491 = vadd.f32 0.0, %v490
    %v492 = vpop.f32.mrb[0].mxu0
    %493 = vmatprep.mubr.f32.mxu0 0.0
    %494 = vmatmul.mubr.f32.gmra.mrb[0].mxu0 %v151
    %v495 = vpop.f32.mrb[0].mxu0
    %v496 = vadd.f32 0.0, %v495
    %v497 = vpop.f32.mrb[0].mxu0
    %498 = vmatprep.mubr.f32.mxu0 0.0
    %499 = vmatmul.mubr.f32.gmra.mrb[0].mxu0 %v154
    %v500 = vpop.f32.mrb[0].mxu0
    %v501 = vadd.f32 0.0, %v500
    %v502 = vpop.f32.mrb[0].mxu0
    %503 = vmatprep.mubr.f32.mxu0 0.0
    %504 = vmatmul.mubr.f32.gmra.mrb[0].mxu0 %v157
    %v505 = vpop.f32.mrb[0].mxu0
    %v506 = vadd.f32 0.0, %v505
    %v507 = vpop.f32.mrb[0].mxu0
    %508 = vdwg.mxu0
    %v509 = vld [vmem:[%s9] sm:$0x1]
    %v511 = vlaneseq
    %v512 = vshrl.u32 %v511, 7
    %v513 = vsub.s32 0, %v512
    %v514 = vrot.slane %v509, %v513
    %v516 = vadd.f32 %v471, %v514
    %v517 = vadd.f32 %v476, %v514
    %v518 = vadd.f32 %v481, %v514
    %v519 = vadd.f32 %v486, %v514
    %v520 = vadd.f32 %v491, %v514
    %v521 = vadd.f32 %v496, %v514
    %v522 = vadd.f32 %v501, %v514
    %v523 = vadd.f32 %v506, %v514
    %s524 = sld [smem:[#allocation3]]
    %v525 = vstv %s524
    %v526 = vmul.f32 %v525, %v520
    %v527 = vmul.f32 %v525, %v521
    %v528 = vmul.f32 %v525, %v522
    %v529 = vmul.f32 %v525, %v523
    %534 = vrot.lane.b32.xlu0 %v526, 112
    %v535 = vpop.permute.xlu0 %534
    %536 = vrot.lane.b32.xlu0 %v527, 112
    %v537 = vpop.permute.xlu0 %536
    %538 = vrot.lane.b32.xlu0 %v528, 112
    %v539 = vpop.permute.xlu0 %538
    %540 = vrot.lane.b32.xlu0 %v529, 112
    %v541 = vpop.permute.xlu0 %540
    %v546 = vsub.f32 %v516, %v535
    %v547 = vsub.f32 %v517, %v537
    %v548 = vsub.f32 %v518, %v539
    %v549 = vsub.f32 %v519, %v541
    %v550 = vld [vmem:[#allocation4] sm:$0x7]
    %v551 = vld [vmem:[%s1] sm:$0xff]
    %v552 = vld [vmem:[%s1 + $0x8] sm:$0xff]
    %v553 = vld [vmem:[%s1 + $0x10] sm:$0xff]
    %v554 = vld [vmem:[%s1 + $0x18] sm:$0xff]
    %v555 = vld [vmem:[%s1 + $0x20] sm:$0xff]
    %v556 = vld [vmem:[%s1 + $0x28] sm:$0xff]
    %v557 = vld [vmem:[%s1 + $0x30] sm:$0xff]
    %v558 = vld [vmem:[%s1 + $0x38] sm:$0xff]
    %v559 = vld [vmem:[%s3] sm:$0x3]
    %v561 = vlaneseq
    %v562 = vshrl.u32 %v561, 7
    %v563 = vsub.s32 0, %v562
    %v564 = vrot.slane %v559, %v563
    %v565 = vlaneseq
    %v566 = vshrl.u32 %v565, 7
    %v567 = vsub.s32 1, %v566
    %v568 = vrot.slane %v559, %v567
    %vm571 = vcmask 261120
    %v573 = vsel %vm571, %v550, 0
    %575 = vmatprep.subr.mxu0 %v552
    %576 = vmatpush1.msra.mxu0 %v551
    %577 = vmatprep.subr.mxu0 %v554
    %578 = vmatpush1.msra.mxu0 %v553
    %579 = vmatprep.subr.mxu0 %v556
    %580 = vmatpush1.msra.mxu0 %v555
    %581 = vmatprep.subr.mxu0 %v558
    %582 = vmatpush1.msra.mxu0 %v557
    %583 = vmatprep.subr.mxu0 0.0
    %584 = vmatpush1.msra.mxu0 0.0
    %585 = vmatprep.subr.mxu0 0.0
    %586 = vmatpush1.msra.mxu0 0.0
    %587 = vmatprep.subr.mxu0 0.0
    %588 = vmatpush1.msra.mxu0 0.0
    %589 = vmatprep.subr.mxu0 0.0
    %590 = vmatpush1.msra.mxu0 0.0
    %591 = vmatprep.subr.mxu0 0.0
    %592 = vmatpush1.msra.mxu0 0.0
    %593 = vmatprep.subr.mxu0 0.0
    %594 = vmatpush1.msra.mxu0 0.0
    %595 = vmatprep.subr.mxu0 0.0
    %596 = vmatpush1.msra.mxu0 0.0
    %597 = vmatprep.subr.mxu0 0.0
    %598 = vmatpush1.msra.mxu0 0.0
    %599 = vmatprep.subr.mxu0 0.0
    %600 = vmatpush1.msra.mxu0 0.0
    %601 = vmatprep.subr.mxu0 0.0
    %602 = vmatpush1.msra.mxu0 0.0
    %603 = vmatprep.subr.mxu0 0.0
    %604 = vmatpush1.msra.mxu0 0.0
    %605 = vmatprep.subr.mxu0 0.0
    %606 = vmatpush1.msra.mxu0 0.0
    %607 = vmatprep.subr.mxu0 0.0
    %608 = vmatpush1.msra.mxu0 0.0
    %609 = vmatprep.subr.mxu0 0.0
    %610 = vmatpush1.msra.mxu0 0.0
    %611 = vmatprep.subr.mxu0 0.0
    %612 = vmatpush1.msra.mxu0 0.0
    %613 = vmatprep.subr.mxu0 0.0
    %614 = vmatpush1.msra.mxu0 0.0
    %615 = vmatprep.subr.mxu0 0.0
    %616 = vmatpush1.msra.mxu0 0.0
    %617 = vmatprep.subr.mxu0 0.0
    %618 = vmatpush1.msra.mxu0 0.0
    %619 = vmatprep.subr.mxu0 0.0
    %620 = vmatpush1.msra.mxu0 0.0
    %621 = vmatprep.subr.mxu0 0.0
    %622 = vmatpush1.msra.mxu0 0.0
    %623 = vmatprep.subr.mxu0 0.0
    %624 = vmatpush1.msra.mxu0 0.0
    %625 = vmatprep.subr.mxu0 0.0
    %626 = vmatpush1.msra.mxu0 0.0
    %627 = vmatprep.subr.mxu0 0.0
    %628 = vmatpush1.msra.mxu0 0.0
    %629 = vmatprep.subr.mxu0 0.0
    %630 = vmatpush1.msra.mxu0 0.0
    %631 = vmatprep.subr.mxu0 0.0
    %632 = vmatpush1.msra.mxu0 0.0
    %633 = vmatprep.subr.mxu0 0.0
    %634 = vmatpush1.msra.mxu0 0.0
    %635 = vmatprep.subr.mxu0 0.0
    %636 = vmatpush1.msra.mxu0 0.0
    %637 = vmatprep.subr.mxu0 0.0
    %638 = vmatpush1.msra.mxu0 0.0
    %639 = vmatprep.mubr.f32.mxu0 0.0
    %640 = vmatmul.mubr.f32.gmra.mrb[0].mxu0 %v573
    %v641 = vpop.f32.mrb[0].mxu0
    %v642 = vadd.f32 %v564, %v641
    %v643 = vpop.f32.mrb[0].mxu0
    %v644 = vadd.f32 %v568, %v643
    %645 = vdwg.mxu0
    %v646 = vld [vmem:[%s2] sm:$0xff]
    %v647 = vld [vmem:[%s2 + $0x8] sm:$0xff]
    %v648 = vld [vmem:[%s2 + $0x10] sm:$0xff]
    %v649 = vld [vmem:[%s2 + $0x18] sm:$0xff]
    %v650 = vld [vmem:[%s2 + $0x20] sm:$0xff]
    %v651 = vld [vmem:[%s2 + $0x28] sm:$0xff]
    %v652 = vld [vmem:[%s2 + $0x30] sm:$0xff]
    %v653 = vld [vmem:[%s2 + $0x38] sm:$0xff]
    %v654 = vld [vmem:[%s2 + $0x40] sm:$0xff]
    %v655 = vld [vmem:[%s2 + $0x48] sm:$0xff]
    %v656 = vld [vmem:[%s2 + $0x50] sm:$0xff]
    %v657 = vld [vmem:[%s2 + $0x58] sm:$0xff]
    %v658 = vld [vmem:[%s2 + $0x60] sm:$0xff]
    %v659 = vld [vmem:[%s2 + $0x68] sm:$0xff]
    %v660 = vld [vmem:[%s2 + $0x70] sm:$0xff]
    %v661 = vld [vmem:[%s2 + $0x78] sm:$0xff]
    %v662 = vld [vmem:[#allocation7] sm:$0x3]
    %v664 = vlaneseq
    %v665 = vshrl.u32 %v664, 7
    %v666 = vsub.s32 0, %v665
    %v667 = vrot.slane %v662, %v666
    %v668 = vlaneseq
    %v669 = vshrl.u32 %v668, 7
    %v670 = vsub.s32 1, %v669
    %v671 = vrot.slane %v662, %v670
    %v675 = vsel %vm134, 0.0, 0
    %677 = vmatprep.subr.mxu0 %v647
    %678 = vmatpush1.msra.mxu0 %v646
    %679 = vmatprep.subr.mxu0 %v649
    %680 = vmatpush1.msra.mxu0 %v648
    %681 = vmatprep.subr.mxu0 %v651
    %682 = vmatpush1.msra.mxu0 %v650
    %683 = vmatprep.subr.mxu0 %v653
    %684 = vmatpush1.msra.mxu0 %v652
    %685 = vmatprep.subr.mxu0 %v655
    %686 = vmatpush1.msra.mxu0 %v654
    %687 = vmatprep.subr.mxu0 %v657
    %688 = vmatpush1.msra.mxu0 %v656
    %689 = vmatprep.subr.mxu0 %v659
    %690 = vmatpush1.msra.mxu0 %v658
    %691 = vmatprep.subr.mxu0 %v661
    %692 = vmatpush1.msra.mxu0 %v660
    %693 = vmatprep.subr.mxu0 0.0
    %694 = vmatpush1.msra.mxu0 0.0
    %695 = vmatprep.subr.mxu0 0.0
    %696 = vmatpush1.msra.mxu0 0.0
    %697 = vmatprep.subr.mxu0 0.0
    %698 = vmatpush1.msra.mxu0 0.0
    %699 = vmatprep.subr.mxu0 0.0
    %700 = vmatpush1.msra.mxu0 0.0
    %701 = vmatprep.subr.mxu0 0.0
    %702 = vmatpush1.msra.mxu0 0.0
    %703 = vmatprep.subr.mxu0 0.0
    %704 = vmatpush1.msra.mxu0 0.0
    %705 = vmatprep.subr.mxu0 0.0
    %706 = vmatpush1.msra.mxu0 0.0
    %707 = vmatprep.subr.mxu0 0.0
    %708 = vmatpush1.msra.mxu0 0.0
    %709 = vmatprep.subr.mxu0 0.0
    %710 = vmatpush1.msra.mxu0 0.0
    %711 = vmatprep.subr.mxu0 0.0
    %712 = vmatpush1.msra.mxu0 0.0
    %713 = vmatprep.subr.mxu0 0.0
    %714 = vmatpush1.msra.mxu0 0.0
    %715 = vmatprep.subr.mxu0 0.0
    %716 = vmatpush1.msra.mxu0 0.0
    %717 = vmatprep.subr.mxu0 0.0
    %718 = vmatpush1.msra.mxu0 0.0
    %719 = vmatprep.subr.mxu0 0.0
    %720 = vmatpush1.msra.mxu0 0.0
    %721 = vmatprep.subr.mxu0 0.0
    %722 = vmatpush1.msra.mxu0 0.0
    %723 = vmatprep.subr.mxu0 0.0
    %724 = vmatpush1.msra.mxu0 0.0
    %725 = vmatprep.subr.mxu0 0.0
    %726 = vmatpush1.msra.mxu0 0.0
    %727 = vmatprep.subr.mxu0 0.0
    %728 = vmatpush1.msra.mxu0 0.0
    %729 = vmatprep.subr.mxu0 0.0
    %730 = vmatpush1.msra.mxu0 0.0
    %731 = vmatprep.subr.mxu0 0.0
    %732 = vmatpush1.msra.mxu0 0.0
    %733 = vmatprep.subr.mxu0 0.0
    %734 = vmatpush1.msra.mxu0 0.0
    %735 = vmatprep.subr.mxu0 0.0
    %736 = vmatpush1.msra.mxu0 0.0
    %737 = vmatprep.subr.mxu0 0.0
    %738 = vmatpush1.msra.mxu0 0.0
    %739 = vmatprep.subr.mxu0 0.0
    %740 = vmatpush1.msra.mxu0 0.0
    %741 = vmatprep.mubr.f32.mxu0 0.0
    %742 = vmatmul.mubr.f32.gmra.mrb[0].mxu0 %v675
    %v743 = vpop.f32.mrb[0].mxu0
    %v744 = vadd.f32 %v667, %v743
    %v745 = vpop.f32.mrb[0].mxu0
    %v746 = vadd.f32 %v671, %v745
    %747 = vdwg.mxu0
    %v748 = vadd.f32 %v642, %v744
    %v749 = vxor.u32 %v748, 2147483648
    %v750 = vmul.f32 %v749, 1.442695
    %v751 = vpow.pop %v750
    %v752 = vadd.f32 %v751, 1.0
    %v753 = vrcp.pop %v752
    %v754 = vmul.f32 1.0, %v753
    %v755 = vmul.f32 %v754, %v746
    %v756 = vadd.f32 %v644, %v755
    %v757 = vtanh.pop %v756
    %v758 = vsub.f32 1.0, %v754
    %760 = vrot.lane.b32.xlu0 %v757, 64
    %v761 = vpop.permute.xlu0 %760
    %v763 = vmul.f32 %v758, %v761
    %v764 = vmul.f32 %v754, 0.0
    %v765 = vadd.f32 %v763, %v764
    %767 = vrot.lane.b32.xlu0 %v765, 64
    %v768 = vpop.permute.xlu0 %767
    %vm770 = vcmask 516096
    %771 = vst.msk [vmem:[#allocation2] sm:$0x1] %vm770, %v768
    %v772 = vsel %vm134, %v768, 0
    %774 = vmatprep.subr.mxu0 %v647
    %775 = vmatpush1.msra.mxu0 %v646
    %776 = vmatprep.subr.mxu0 %v649
    %777 = vmatpush1.msra.mxu0 %v648
    %778 = vmatprep.subr.mxu0 %v651
    %779 = vmatpush1.msra.mxu0 %v650
    %780 = vmatprep.subr.mxu0 %v653
    %781 = vmatpush1.msra.mxu0 %v652
    %782 = vmatprep.subr.mxu0 %v655
    %783 = vmatpush1.msra.mxu0 %v654
    %784 = vmatprep.subr.mxu0 %v657
    %785 = vmatpush1.msra.mxu0 %v656
    %786 = vmatprep.subr.mxu0 %v659
    %787 = vmatpush1.msra.mxu0 %v658
    %788 = vmatprep.subr.mxu0 %v661
    %789 = vmatpush1.msra.mxu0 %v660
    %790 = vmatprep.subr.mxu0 0.0
    %791 = vmatpush1.msra.mxu0 0.0
    %792 = vmatprep.subr.mxu0 0.0
    %793 = vmatpush1.msra.mxu0 0.0
    %794 = vmatprep.subr.mxu0 0.0
    %795 = vmatpush1.msra.mxu0 0.0
    %796 = vmatprep.subr.mxu0 0.0
    %797 = vmatpush1.msra.mxu0 0.0
    %798 = vmatprep.subr.mxu0 0.0
    %799 = vmatpush1.msra.mxu0 0.0
    %800 = vmatprep.subr.mxu0 0.0
    %801 = vmatpush1.msra.mxu0 0.0
    %802 = vmatprep.subr.mxu0 0.0
    %803 = vmatpush1.msra.mxu0 0.0
    %804 = vmatprep.subr.mxu0 0.0
    %805 = vmatpush1.msra.mxu0 0.0
    %806 = vmatprep.subr.mxu0 0.0
    %807 = vmatpush1.msra.mxu0 0.0
    %808 = vmatprep.subr.mxu0 0.0
    %809 = vmatpush1.msra.mxu0 0.0
    %810 = vmatprep.subr.mxu0 0.0
    %811 = vmatpush1.msra.mxu0 0.0
    %812 = vmatprep.subr.mxu0 0.0
    %813 = vmatpush1.msra.mxu0 0.0
    %814 = vmatprep.subr.mxu0 0.0
    %815 = vmatpush1.msra.mxu0 0.0
    %816 = vmatprep.subr.mxu0 0.0
    %817 = vmatpush1.msra.mxu0 0.0
    %818 = vmatprep.subr.mxu0 0.0
    %819 = vmatpush1.msra.mxu0 0.0
    %820 = vmatprep.subr.mxu0 0.0
    %821 = vmatpush1.msra.mxu0 0.0
    %822 = vmatprep.subr.mxu0 0.0
    %823 = vmatpush1.msra.mxu0 0.0
    %824 = vmatprep.subr.mxu0 0.0
    %825 = vmatpush1.msra.mxu0 0.0
    %826 = vmatprep.subr.mxu0 0.0
    %827 = vmatpush1.msra.mxu0 0.0
    %828 = vmatprep.subr.mxu0 0.0
    %829 = vmatpush1.msra.mxu0 0.0
    %830 = vmatprep.subr.mxu0 0.0
    %831 = vmatpush1.msra.mxu0 0.0
    %832 = vmatprep.subr.mxu0 0.0
    %833 = vmatpush1.msra.mxu0 0.0
    %834 = vmatprep.subr.mxu0 0.0
    %835 = vmatpush1.msra.mxu0 0.0
    %836 = vmatprep.subr.mxu0 0.0
    %837 = vmatpush1.msra.mxu0 0.0
    %838 = vmatprep.mubr.f32.mxu0 0.0
    %839 = vmatmul.mubr.f32.gmra.mrb[0].mxu0 %v772
    %v840 = vpop.f32.mrb[0].mxu0
    %v841 = vadd.f32 %v667, %v840
    %v842 = vpop.f32.mrb[0].mxu0
    %v843 = vadd.f32 %v671, %v842
    %844 = vdwg.mxu0
    %v846 = vrot.slane %v841, 7
    %v848 = vadd.f32 %v642, %v846
    %v849 = vxor.u32 %v848, 2147483648
    %v850 = vmul.f32 %v849, 1.442695
    %v851 = vpow.pop %v850
    %v852 = vadd.f32 %v851, 1.0
    %v853 = vrcp.pop %v852
    %v854 = vmul.f32 1.0, %v853
    %v856 = vrot.slane %v843, 7
    %v858 = vmul.f32 %v854, %v856
    %v859 = vadd.f32 %v644, %v858
    %v860 = vtanh.pop %v859
    %v861 = vsub.f32 1.0, %v854
    %863 = vrot.lane.b32.xlu0 %v860, 64
    %v864 = vpop.permute.xlu0 %863
    %v866 = vmul.f32 %v861, %v864
    %v867 = vrot.slane %v765, 7
    %v869 = vmul.f32 %v854, %v867
    %v870 = vadd.f32 %v866, %v869
    %872 = vrot.lane.b32.xlu0 %v870, 64
    %v873 = vpop.permute.xlu0 %872
    %vm875 = vcmask 517121
    %876 = vst.msk [vmem:[#allocation2] sm:$0x2] %vm875, %v873
    %v877 = vrot.slane %v870, 1
    %878 = vrot.lane.b32.xlu0 %v877, 64
    %v879 = vpop.permute.xlu0 %878
    %v880 = vsel %vm134, %v879, 0
    %882 = vmatprep.subr.mxu0 %v647
    %883 = vmatpush1.msra.mxu0 %v646
    %884 = vmatprep.subr.mxu0 %v649
    %885 = vmatpush1.msra.mxu0 %v648
    %886 = vmatprep.subr.mxu0 %v651
    %887 = vmatpush1.msra.mxu0 %v650
    %888 = vmatprep.subr.mxu0 %v653
    %889 = vmatpush1.msra.mxu0 %v652
    %890 = vmatprep.subr.mxu0 %v655
    %891 = vmatpush1.msra.mxu0 %v654
    %892 = vmatprep.subr.mxu0 %v657
    %893 = vmatpush1.msra.mxu0 %v656
    %894 = vmatprep.subr.mxu0 %v659
    %895 = vmatpush1.msra.mxu0 %v658
    %896 = vmatprep.subr.mxu0 %v661
    %897 = vmatpush1.msra.mxu0 %v660
    %898 = vmatprep.subr.mxu0 0.0
    %899 = vmatpush1.msra.mxu0 0.0
    %900 = vmatprep.subr.mxu0 0.0
    %901 = vmatpush1.msra.mxu0 0.0
    %902 = vmatprep.subr.mxu0 0.0
    %903 = vmatpush1.msra.mxu0 0.0
    %904 = vmatprep.subr.mxu0 0.0
    %905 = vmatpush1.msra.mxu0 0.0
    %906 = vmatprep.subr.mxu0 0.0
    %907 = vmatpush1.msra.mxu0 0.0
    %908 = vmatprep.subr.mxu0 0.0
    %909 = vmatpush1.msra.mxu0 0.0
    %910 = vmatprep.subr.mxu0 0.0
    %911 = vmatpush1.msra.mxu0 0.0
    %912 = vmatprep.subr.mxu0 0.0
    %913 = vmatpush1.msra.mxu0 0.0
    %914 = vmatprep.subr.mxu0 0.0
    %915 = vmatpush1.msra.mxu0 0.0
    %916 = vmatprep.subr.mxu0 0.0
    %917 = vmatpush1.msra.mxu0 0.0
    %918 = vmatprep.subr.mxu0 0.0
    %919 = vmatpush1.msra.mxu0 0.0
    %920 = vmatprep.subr.mxu0 0.0
    %921 = vmatpush1.msra.mxu0 0.0
    %922 = vmatprep.subr.mxu0 0.0
    %923 = vmatpush1.msra.mxu0 0.0
    %924 = vmatprep.subr.mxu0 0.0
    %925 = vmatpush1.msra.mxu0 0.0
    %926 = vmatprep.subr.mxu0 0.0
    %927 = vmatpush1.msra.mxu0 0.0
    %928 = vmatprep.subr.mxu0 0.0
    %929 = vmatpush1.msra.mxu0 0.0
    %930 = vmatprep.subr.mxu0 0.0
    %931 = vmatpush1.msra.mxu0 0.0
    %932 = vmatprep.subr.mxu0 0.0
    %933 = vmatpush1.msra.mxu0 0.0
    %934 = vmatprep.subr.mxu0 0.0
    %935 = vmatpush1.msra.mxu0 0.0
    %936 = vmatprep.subr.mxu0 0.0
    %937 = vmatpush1.msra.mxu0 0.0
    %938 = vmatprep.subr.mxu0 0.0
    %939 = vmatpush1.msra.mxu0 0.0
    %940 = vmatprep.subr.mxu0 0.0
    %941 = vmatpush1.msra.mxu0 0.0
    %942 = vmatprep.subr.mxu0 0.0
    %943 = vmatpush1.msra.mxu0 0.0
    %944 = vmatprep.subr.mxu0 0.0
    %945 = vmatpush1.msra.mxu0 0.0
    %946 = vmatprep.mubr.f32.mxu0 0.0
    %947 = vmatmul.mubr.f32.gmra.mrb[0].mxu0 %v880
    %v948 = vpop.f32.mrb[0].mxu0
    %v949 = vadd.f32 %v667, %v948
    %v950 = vpop.f32.mrb[0].mxu0
    %v951 = vadd.f32 %v671, %v950
    %952 = vdwg.mxu0
    %v954 = vrot.slane %v949, 6
    %v956 = vadd.f32 %v642, %v954
    %v957 = vxor.u32 %v956, 2147483648
    %v958 = vmul.f32 %v957, 1.442695
    %v959 = vpow.pop %v958
    %v960 = vadd.f32 %v959, 1.0
    %v961 = vrcp.pop %v960
    %v962 = vmul.f32 1.0, %v961
    %v964 = vrot.slane %v951, 6
    %v966 = vmul.f32 %v962, %v964
    %v967 = vadd.f32 %v644, %v966
    %v968 = vtanh.pop %v967
    %v969 = vsub.f32 1.0, %v962
    %971 = vrot.lane.b32.xlu0 %v968, 64
    %v972 = vpop.permute.xlu0 %971
    %v974 = vmul.f32 %v969, %v972
    %v975 = vrot.slane %v870, 7
    %v977 = vmul.f32 %v962, %v975
    %v978 = vadd.f32 %v974, %v977
    %980 = vrot.lane.b32.xlu0 %v978, 64
    %v981 = vpop.permute.xlu0 %980
    %vm983 = vcmask 518146
    %984 = vst.msk [vmem:[#allocation2] sm:$0x4] %vm983, %v981
    %v985 = vld [vmem:[#allocation2] sm:$0x7]
    %v986 = vmax.f32 %v985, 0.0
    %v987 = vld [vmem:[%s11] sm:$0xff]
    %v988 = vld [vmem:[%s11 + $0x8] sm:$0xff]
    %v989 = vld [vmem:[%s11 + $0x10] sm:$0xff]
    %v990 = vld [vmem:[%s11 + $0x18] sm:$0xff]
    %v991 = vld [vmem:[%s11 + $0x20] sm:$0xff]
    %v992 = vld [vmem:[%s11 + $0x28] sm:$0xff]
    %v993 = vld [vmem:[%s11 + $0x30] sm:$0xff]
    %v994 = vld [vmem:[%s11 + $0x38] sm:$0xff]
    %v995 = vld [vmem:[#allocation10] sm:$0x1]
    %v997 = vlaneseq
    %v998 = vshrl.u32 %v997, 7
    %v999 = vsub.s32 0, %v998
    %v1000 = vrot.slane %v995, %v999
    %v1003 = vsel %vm134, %v986, 0
    %1005 = vmatprep.subr.mxu0 0.0
    %1006 = vmatpush1.msra.mxu0 %v987
    %1007 = vmatprep.subr.mxu0 0.0
    %1008 = vmatpush1.msra.mxu0 %v988
    %1009 = vmatprep.subr.mxu0 0.0
    %1010 = vmatpush1.msra.mxu0 %v989
    %1011 = vmatprep.subr.mxu0 0.0
    %1012 = vmatpush1.msra.mxu0 %v990
    %1013 = vmatprep.subr.mxu0 0.0
    %1014 = vmatpush1.msra.mxu0 %v991
    %1015 = vmatprep.subr.mxu0 0.0
    %1016 = vmatpush1.msra.mxu0 %v992
    %1017 = vmatprep.subr.mxu0 0.0
    %1018 = vmatpush1.msra.mxu0 %v993
    %1019 = vmatprep.subr.mxu0 0.0
    %1020 = vmatpush1.msra.mxu0 %v994
    %1021 = vmatprep.subr.mxu0 0.0
    %1022 = vmatpush1.msra.mxu0 0.0
    %1023 = vmatprep.subr.mxu0 0.0
    %1024 = vmatpush1.msra.mxu0 0.0
    %1025 = vmatprep.subr.mxu0 0.0
    %1026 = vmatpush1.msra.mxu0 0.0
    %1027 = vmatprep.subr.mxu0 0.0
    %1028 = vmatpush1.msra.mxu0 0.0
    %1029 = vmatprep.subr.mxu0 0.0
    %1030 = vmatpush1.msra.mxu0 0.0
    %1031 = vmatprep.subr.mxu0 0.0
    %1032 = vmatpush1.msra.mxu0 0.0
    %1033 = vmatprep.subr.mxu0 0.0
    %1034 = vmatpush1.msra.mxu0 0.0
    %1035 = vmatprep.subr.mxu0 0.0
    %1036 = vmatpush1.msra.mxu0 0.0
    %1037 = vmatprep.subr.mxu0 0.0
    %1038 = vmatpush1.msra.mxu0 0.0
    %1039 = vmatprep.subr.mxu0 0.0
    %1040 = vmatpush1.msra.mxu0 0.0
    %1041 = vmatprep.subr.mxu0 0.0
    %1042 = vmatpush1.msra.mxu0 0.0
    %1043 = vmatprep.subr.mxu0 0.0
    %1044 = vmatpush1.msra.mxu0 0.0
    %1045 = vmatprep.subr.mxu0 0.0
    %1046 = vmatpush1.msra.mxu0 0.0
    %1047 = vmatprep.subr.mxu0 0.0
    %1048 = vmatpush1.msra.mxu0 0.0
    %1049 = vmatprep.subr.mxu0 0.0
    %1050 = vmatpush1.msra.mxu0 0.0
    %1051 = vmatprep.subr.mxu0 0.0
    %1052 = vmatpush1.msra.mxu0 0.0
    %1053 = vmatprep.subr.mxu0 0.0
    %1054 = vmatpush1.msra.mxu0 0.0
    %1055 = vmatprep.subr.mxu0 0.0
    %1056 = vmatpush1.msra.mxu0 0.0
    %1057 = vmatprep.subr.mxu0 0.0
    %1058 = vmatpush1.msra.mxu0 0.0
    %1059 = vmatprep.subr.mxu0 0.0
    %1060 = vmatpush1.msra.mxu0 0.0
    %1061 = vmatprep.subr.mxu0 0.0
    %1062 = vmatpush1.msra.mxu0 0.0
    %1063 = vmatprep.subr.mxu0 0.0
    %1064 = vmatpush1.msra.mxu0 0.0
    %1065 = vmatprep.subr.mxu0 0.0
    %1066 = vmatpush1.msra.mxu0 0.0
    %1067 = vmatprep.subr.mxu0 0.0
    %1068 = vmatpush1.msra.mxu0 0.0
    %1069 = vmatprep.mubr.f32.mxu0 0.0
    %1070 = vmatmul.mubr.f32.gmra.mrb[0].mxu0 %v1003
    %v1071 = vpop.f32.mrb[0].mxu0
    %v1072 = vadd.f32 %v1000, %v1071
    %v1073 = vpop.f32.mrb[0].mxu0
    %1074 = vdwg.mxu0
    %v1076 = vrot.slane %v1072, 2
    %v1077 = vsel %vm274, %v1076, 0
    %v1080 = vsel %vm274, %v546, 0
    %v1083 = vsel %vm274, %v547, 0
    %v1086 = vsel %vm274, %v548, 0
    %v1089 = vsel %vm274, %v549, 0
    %1091 = vmatprep.subr.mxu0 0.0
    %1092 = vmatpush1.xpose.msra.mxu0 %v1080
    %1093 = vmatprep.subr.mxu0 0.0
    %1094 = vmatpush1.xpose.msra.mxu0 %v1083
    %1095 = vmatprep.subr.mxu0 0.0
    %1096 = vmatpush1.xpose.msra.mxu0 %v1086
    %1097 = vmatprep.subr.mxu0 0.0
    %1098 = vmatpush1.xpose.msra.mxu0 %v1089
    %1099 = vmatprep.subr.mxu0 0.0
    %1100 = vmatpush1.xpose.msra.mxu0 0.0
    %1101 = vmatprep.subr.mxu0 0.0
    %1102 = vmatpush1.xpose.msra.mxu0 0.0
    %1103 = vmatprep.subr.mxu0 0.0
    %1104 = vmatpush1.xpose.msra.mxu0 0.0
    %1105 = vmatprep.subr.mxu0 0.0
    %1106 = vmatpush1.xpose.msra.mxu0 0.0
    %1107 = vmatprep.subr.mxu0 0.0
    %1108 = vmatpush1.xpose.msra.mxu0 0.0
    %1109 = vmatprep.subr.mxu0 0.0
    %1110 = vmatpush1.xpose.msra.mxu0 0.0
    %1111 = vmatprep.subr.mxu0 0.0
    %1112 = vmatpush1.xpose.msra.mxu0 0.0
    %1113 = vmatprep.subr.mxu0 0.0
    %1114 = vmatpush1.xpose.msra.mxu0 0.0
    %1115 = vmatprep.subr.mxu0 0.0
    %1116 = vmatpush1.xpose.msra.mxu0 0.0
    %1117 = vmatprep.subr.mxu0 0.0
    %1118 = vmatpush1.xpose.msra.mxu0 0.0
    %1119 = vmatprep.subr.mxu0 0.0
    %1120 = vmatpush1.xpose.msra.mxu0 0.0
    %1121 = vmatprep.subr.mxu0 0.0
    %1122 = vmatpush1.xpose.msra.mxu0 0.0
    %1123 = vmatprep.subr.mxu0 0.0
    %1124 = vmatpush1.xpose.msra.mxu0 0.0
    %1125 = vmatprep.subr.mxu0 0.0
    %1126 = vmatpush1.xpose.msra.mxu0 0.0
    %1127 = vmatprep.subr.mxu0 0.0
    %1128 = vmatpush1.xpose.msra.mxu0 0.0
    %1129 = vmatprep.subr.mxu0 0.0
    %1130 = vmatpush1.xpose.msra.mxu0 0.0
    %1131 = vmatprep.subr.mxu0 0.0
    %1132 = vmatpush1.xpose.msra.mxu0 0.0
    %1133 = vmatprep.subr.mxu0 0.0
    %1134 = vmatpush1.xpose.msra.mxu0 0.0
    %1135 = vmatprep.subr.mxu0 0.0
    %1136 = vmatpush1.xpose.msra.mxu0 0.0
    %1137 = vmatprep.subr.mxu0 0.0
    %1138 = vmatpush1.xpose.msra.mxu0 0.0
    %1139 = vmatprep.subr.mxu0 0.0
    %1140 = vmatpush1.xpose.msra.mxu0 0.0
    %1141 = vmatprep.subr.mxu0 0.0
    %1142 = vmatpush1.xpose.msra.mxu0 0.0
    %1143 = vmatprep.subr.mxu0 0.0
    %1144 = vmatpush1.xpose.msra.mxu0 0.0
    %1145 = vmatprep.subr.mxu0 0.0
    %1146 = vmatpush1.xpose.msra.mxu0 0.0
    %1147 = vmatprep.subr.mxu0 0.0
    %1148 = vmatpush1.xpose.msra.mxu0 0.0
    %1149 = vmatprep.subr.mxu0 0.0
    %1150 = vmatpush1.xpose.msra.mxu0 0.0
    %1151 = vmatprep.subr.mxu0 0.0
    %1152 = vmatpush1.xpose.msra.mxu0 0.0
    %1153 = vmatprep.subr.mxu0 0.0
    %1154 = vmatpush1.xpose.msra.mxu0 0.0
    %1155 = vmatprep.mubr.f32.mxu0 0.0
    %1156 = vmatmul.mubr.f32.gmra.mrb[0].mxu0 %v1077
    %v1157 = vpop.f32.mrb[0].mxu0
    %v1158 = vadd.f32 0.0, %v1157
    %v1159 = vpop.f32.mrb[0].mxu0
    %1160 = vdwg.mxu0
    %vm1161 = vcmask 253952
    %v1162 = vsel %vm1161, %v1158, -inf
    %1163 = vmax.xlane.f32.xlu0 %v1162
    %v1164 = vpop.xlane.xlu0 %1163
    %v1165 = vsub.f32 %v1158, %v1164
    %v1166 = vmul.f32 %v1165, 1.442695
    %v1167 = vpow.pop %v1166
    %v1168 = vsel %vm1161, %v1167, 0.0
    %1169 = vadd.xlane.f32.xlu0 %v1168
    %v1170 = vpop.xlane.xlu0 %1169
    %v1171 = vrcp.pop %v1170
    %v1172 = vmul.f32 %v1167, %v1171
    %v1174 = vsel %vm571, %v1172, 0
    %1176 = vmatprep.subr.mxu0 0.0
    %1177 = vmatpush1.msra.mxu0 %v546
    %1178 = vmatprep.subr.mxu0 0.0
    %1179 = vmatpush1.msra.mxu0 %v547
    %1180 = vmatprep.subr.mxu0 0.0
    %1181 = vmatpush1.msra.mxu0 %v548
    %1182 = vmatprep.subr.mxu0 0.0
    %1183 = vmatpush1.msra.mxu0 %v549
    %1184 = vmatprep.subr.mxu0 0.0
    %1185 = vmatpush1.msra.mxu0 0.0
    %1186 = vmatprep.subr.mxu0 0.0
    %1187 = vmatpush1.msra.mxu0 0.0
    %1188 = vmatprep.subr.mxu0 0.0
    %1189 = vmatpush1.msra.mxu0 0.0
    %1190 = vmatprep.subr.mxu0 0.0
    %1191 = vmatpush1.msra.mxu0 0.0
    %1192 = vmatprep.subr.mxu0 0.0
    %1193 = vmatpush1.msra.mxu0 0.0
    %1194 = vmatprep.subr.mxu0 0.0
    %1195 = vmatpush1.msra.mxu0 0.0
    %1196 = vmatprep.subr.mxu0 0.0
    %1197 = vmatpush1.msra.mxu0 0.0
    %1198 = vmatprep.subr.mxu0 0.0
    %1199 = vmatpush1.msra.mxu0 0.0
    %1200 = vmatprep.subr.mxu0 0.0
    %1201 = vmatpush1.msra.mxu0 0.0
    %1202 = vmatprep.subr.mxu0 0.0
    %1203 = vmatpush1.msra.mxu0 0.0
    %1204 = vmatprep.subr.mxu0 0.0
    %1205 = vmatpush1.msra.mxu0 0.0
    %1206 = vmatprep.subr.mxu0 0.0
    %1207 = vmatpush1.msra.mxu0 0.0
    %1208 = vmatprep.subr.mxu0 0.0
    %1209 = vmatpush1.msra.mxu0 0.0
    %1210 = vmatprep.subr.mxu0 0.0
    %1211 = vmatpush1.msra.mxu0 0.0
    %1212 = vmatprep.subr.mxu0 0.0
    %1213 = vmatpush1.msra.mxu0 0.0
    %1214 = vmatprep.subr.mxu0 0.0
    %1215 = vmatpush1.msra.mxu0 0.0
    %1216 = vmatprep.subr.mxu0 0.0
    %1217 = vmatpush1.msra.mxu0 0.0
    %1218 = vmatprep.subr.mxu0 0.0
    %1219 = vmatpush1.msra.mxu0 0.0
    %1220 = vmatprep.subr.mxu0 0.0
    %1221 = vmatpush1.msra.mxu0 0.0
    %1222 = vmatprep.subr.mxu0 0.0
    %1223 = vmatpush1.msra.mxu0 0.0
    %1224 = vmatprep.subr.mxu0 0.0
    %1225 = vmatpush1.msra.mxu0 0.0
    %1226 = vmatprep.subr.mxu0 0.0
    %1227 = vmatpush1.msra.mxu0 0.0
    %1228 = vmatprep.subr.mxu0 0.0
    %1229 = vmatpush1.msra.mxu0 0.0
    %1230 = vmatprep.subr.mxu0 0.0
    %1231 = vmatpush1.msra.mxu0 0.0
    %1232 = vmatprep.subr.mxu0 0.0
    %1233 = vmatpush1.msra.mxu0 0.0
    %1234 = vmatprep.subr.mxu0 0.0
    %1235 = vmatpush1.msra.mxu0 0.0
    %1236 = vmatprep.subr.mxu0 0.0
    %1237 = vmatpush1.msra.mxu0 0.0
    %1238 = vmatprep.subr.mxu0 0.0
    %1239 = vmatpush1.msra.mxu0 0.0
    %1240 = vmatprep.mubr.f32.mxu0 0.0
    %1241 = vmatmul.mubr.f32.gmra.mrb[0].mxu0 %v1174
    %v1242 = vpop.f32.mrb[0].mxu0
    %v1243 = vadd.f32 0.0, %v1242
    %v1244 = vpop.f32.mrb[0].mxu0
    %1245 = vdwg.mxu0
    %v1246 = vsel %vm274, %v1072, 0
    %1248 = vmatprep.subr.mxu0 0.0
    %1249 = vmatpush1.xpose.msra.mxu0 %v1246
    %1250 = vmatprep.subr.mxu0 0.0
    %1251 = vmatpush1.xpose.msra.mxu0 0.0
    %1252 = vmatprep.subr.mxu0 0.0
    %1253 = vmatpush1.xpose.msra.mxu0 0.0
    %1254 = vmatprep.subr.mxu0 0.0
    %1255 = vmatpush1.xpose.msra.mxu0 0.0
    %1256 = vmatprep.subr.mxu0 0.0
    %1257 = vmatpush1.xpose.msra.mxu0 0.0
    %1258 = vmatprep.subr.mxu0 0.0
    %1259 = vmatpush1.xpose.msra.mxu0 0.0
    %1260 = vmatprep.subr.mxu0 0.0
    %1261 = vmatpush1.xpose.msra.mxu0 0.0
    %1262 = vmatprep.subr.mxu0 0.0
    %1263 = vmatpush1.xpose.msra.mxu0 0.0
    %1264 = vmatprep.subr.mxu0 0.0
    %1265 = vmatpush1.xpose.msra.mxu0 0.0
    %1266 = vmatprep.subr.mxu0 0.0
    %1267 = vmatpush1.xpose.msra.mxu0 0.0
    %1268 = vmatprep.subr.mxu0 0.0
    %1269 = vmatpush1.xpose.msra.mxu0 0.0
    %1270 = vmatprep.subr.mxu0 0.0
    %1271 = vmatpush1.xpose.msra.mxu0 0.0
    %1272 = vmatprep.subr.mxu0 0.0
    %1273 = vmatpush1.xpose.msra.mxu0 0.0
    %1274 = vmatprep.subr.mxu0 0.0
    %1275 = vmatpush1.xpose.msra.mxu0 0.0
    %1276 = vmatprep.subr.mxu0 0.0
    %1277 = vmatpush1.xpose.msra.mxu0 0.0
    %1278 = vmatprep.subr.mxu0 0.0
    %1279 = vmatpush1.xpose.msra.mxu0 0.0
    %1280 = vmatprep.subr.mxu0 0.0
    %1281 = vmatpush1.xpose.msra.mxu0 0.0
    %1282 = vmatprep.subr.mxu0 0.0
    %1283 = vmatpush1.xpose.msra.mxu0 0.0
    %1284 = vmatprep.subr.mxu0 0.0
    %1285 = vmatpush1.xpose.msra.mxu0 0.0
    %1286 = vmatprep.subr.mxu0 0.0
    %1287 = vmatpush1.xpose.msra.mxu0 0.0
    %1288 = vmatprep.subr.mxu0 0.0
    %1289 = vmatpush1.xpose.msra.mxu0 0.0
    %1290 = vmatprep.subr.mxu0 0.0
    %1291 = vmatpush1.xpose.msra.mxu0 0.0
    %1292 = vmatprep.subr.mxu0 0.0
    %1293 = vmatpush1.xpose.msra.mxu0 0.0
    %1294 = vmatprep.subr.mxu0 0.0
    %1295 = vmatpush1.xpose.msra.mxu0 0.0
    %1296 = vmatprep.subr.mxu0 0.0
    %1297 = vmatpush1.xpose.msra.mxu0 0.0
    %1298 = vmatprep.subr.mxu0 0.0
    %1299 = vmatpush1.xpose.msra.mxu0 0.0
    %1300 = vmatprep.subr.mxu0 0.0
    %1301 = vmatpush1.xpose.msra.mxu0 0.0
    %1302 = vmatprep.subr.mxu0 0.0
    %1303 = vmatpush1.xpose.msra.mxu0 0.0
    %1304 = vmatprep.subr.mxu0 0.0
    %1305 = vmatpush1.xpose.msra.mxu0 0.0
    %1306 = vmatprep.subr.mxu0 0.0
    %1307 = vmatpush1.xpose.msra.mxu0 0.0
    %1308 = vmatprep.subr.mxu0 0.0
    %1309 = vmatpush1.xpose.msra.mxu0 0.0
    %1310 = vmatprep.subr.mxu0 0.0
    %1311 = vmatpush1.xpose.msra.mxu0 0.0
    %1312 = vmatprep.mubr.f32.mxu0 0.0
    %1313 = vmatmul.mubr.f32.gmra.mrb[0].mxu0 %v1077
    %v1314 = vpop.f32.mrb[0].mxu0
    %v1315 = vadd.f32 0.0, %v1314
    %v1316 = vpop.f32.mrb[0].mxu0
    %1317 = vdwg.mxu0
    %vm1318 = vcmask 8192
    %v1319 = vsel %vm1318, %v1315, -inf
    %1320 = vmax.xlane.f32.xlu0 %v1319
    %v1321 = vpop.xlane.xlu0 %1320
    %v1322 = vsub.f32 %v1315, %v1321
    %v1323 = vmul.f32 %v1322, 1.442695
    %v1324 = vpow.pop %v1323
    %v1325 = vsel %vm1318, %v1324, 0.0
    %1326 = vadd.xlane.f32.xlu0 %v1325
    %v1327 = vpop.xlane.xlu0 %1326
    %v1328 = vrcp.pop %v1327
    %v1329 = vmul.f32 %v1324, %v1328
    %v1330 = vld [vmem:[%s13] sm:$0x3]
    %vm1331 = vcmask 15360
    %v1333 = vsel %vm1331, %v1329, 0
    %vm1335 = vcmask 1041408
    %v1337 = vsel %vm1335, %v1330, 0
    %1339 = vmatprep.subr.mxu0 0.0
    %1340 = vmatpush1.msra.mxu0 %v1337
    %1341 = vmatprep.subr.mxu0 0.0
    %1342 = vmatpush1.msra.mxu0 0.0
    %1343 = vmatprep.subr.mxu0 0.0
    %1344 = vmatpush1.msra.mxu0 0.0
    %1345 = vmatprep.subr.mxu0 0.0
    %1346 = vmatpush1.msra.mxu0 0.0
    %1347 = vmatprep.subr.mxu0 0.0
    %1348 = vmatpush1.msra.mxu0 0.0
    %1349 = vmatprep.subr.mxu0 0.0
    %1350 = vmatpush1.msra.mxu0 0.0
    %1351 = vmatprep.subr.mxu0 0.0
    %1352 = vmatpush1.msra.mxu0 0.0
    %1353 = vmatprep.subr.mxu0 0.0
    %1354 = vmatpush1.msra.mxu0 0.0
    %1355 = vmatprep.subr.mxu0 0.0
    %1356 = vmatpush1.msra.mxu0 0.0
    %1357 = vmatprep.subr.mxu0 0.0
    %1358 = vmatpush1.msra.mxu0 0.0
    %1359 = vmatprep.subr.mxu0 0.0
    %1360 = vmatpush1.msra.mxu0 0.0
    %1361 = vmatprep.subr.mxu0 0.0
    %1362 = vmatpush1.msra.mxu0 0.0
    %1363 = vmatprep.subr.mxu0 0.0
    %1364 = vmatpush1.msra.mxu0 0.0
    %1365 = vmatprep.subr.mxu0 0.0
    %1366 = vmatpush1.msra.mxu0 0.0
    %1367 = vmatprep.subr.mxu0 0.0
    %1368 = vmatpush1.msra.mxu0 0.0
    %1369 = vmatprep.subr.mxu0 0.0
    %1370 = vmatpush1.msra.mxu0 0.0
    %1371 = vmatprep.subr.mxu0 0.0
    %1372 = vmatpush1.msra.mxu0 0.0
    %1373 = vmatprep.subr.mxu0 0.0
    %1374 = vmatpush1.msra.mxu0 0.0
    %1375 = vmatprep.subr.mxu0 0.0
    %1376 = vmatpush1.msra.mxu0 0.0
    %1377 = vmatprep.subr.mxu0 0.0
    %1378 = vmatpush1.msra.mxu0 0.0
    %1379 = vmatprep.subr.mxu0 0.0
    %1380 = vmatpush1.msra.mxu0 0.0
    %1381 = vmatprep.subr.mxu0 0.0
    %1382 = vmatpush1.msra.mxu0 0.0
    %1383 = vmatprep.subr.mxu0 0.0
    %1384 = vmatpush1.msra.mxu0 0.0
    %1385 = vmatprep.subr.mxu0 0.0
    %1386 = vmatpush1.msra.mxu0 0.0
    %1387 = vmatprep.subr.mxu0 0.0
    %1388 = vmatpush1.msra.mxu0 0.0
    %1389 = vmatprep.subr.mxu0 0.0
    %1390 = vmatpush1.msra.mxu0 0.0
    %1391 = vmatprep.subr.mxu0 0.0
    %1392 = vmatpush1.msra.mxu0 0.0
    %1393 = vmatprep.subr.mxu0 0.0
    %1394 = vmatpush1.msra.mxu0 0.0
    %1395 = vmatprep.subr.mxu0 0.0
    %1396 = vmatpush1.msra.mxu0 0.0
    %1397 = vmatprep.subr.mxu0 0.0
    %1398 = vmatpush1.msra.mxu0 0.0
    %1399 = vmatprep.subr.mxu0 0.0
    %1400 = vmatpush1.msra.mxu0 0.0
    %1401 = vmatprep.subr.mxu0 0.0
    %1402 = vmatpush1.msra.mxu0 0.0
    %1403 = vmatprep.mubr.f32.mxu0 0.0
    %1404 = vmatmul.mubr.f32.gmra.mrb[0].mxu0 %v1333
    %v1405 = vpop.f32.mrb[0].mxu0
    %v1406 = vadd.f32 0.0, %v1405
    %v1407 = vpop.f32.mrb[0].mxu0
    %1408 = vdwg.mxu0
    %v1410 = vsel %vm571, %v1406, 0
    %1412 = vmatprep.subr.mxu0 0.0
    %1413 = vmatpush1.msra.mxu0 %v546
    %1414 = vmatprep.subr.mxu0 0.0
    %1415 = vmatpush1.msra.mxu0 %v547
    %1416 = vmatprep.subr.mxu0 0.0
    %1417 = vmatpush1.msra.mxu0 %v548
    %1418 = vmatprep.subr.mxu0 0.0
    %1419 = vmatpush1.msra.mxu0 %v549
    %1420 = vmatprep.subr.mxu0 0.0
    %1421 = vmatpush1.msra.mxu0 0.0
    %1422 = vmatprep.subr.mxu0 0.0
    %1423 = vmatpush1.msra.mxu0 0.0
    %1424 = vmatprep.subr.mxu0 0.0
    %1425 = vmatpush1.msra.mxu0 0.0
    %1426 = vmatprep.subr.mxu0 0.0
    %1427 = vmatpush1.msra.mxu0 0.0
    %1428 = vmatprep.subr.mxu0 0.0
    %1429 = vmatpush1.msra.mxu0 0.0
    %1430 = vmatprep.subr.mxu0 0.0
    %1431 = vmatpush1.msra.mxu0 0.0
    %1432 = vmatprep.subr.mxu0 0.0
    %1433 = vmatpush1.msra.mxu0 0.0
    %1434 = vmatprep.subr.mxu0 0.0
    %1435 = vmatpush1.msra.mxu0 0.0
    %1436 = vmatprep.subr.mxu0 0.0
    %1437 = vmatpush1.msra.mxu0 0.0
    %1438 = vmatprep.subr.mxu0 0.0
    %1439 = vmatpush1.msra.mxu0 0.0
    %1440 = vmatprep.subr.mxu0 0.0
    %1441 = vmatpush1.msra.mxu0 0.0
    %1442 = vmatprep.subr.mxu0 0.0
    %1443 = vmatpush1.msra.mxu0 0.0
    %1444 = vmatprep.subr.mxu0 0.0
    %1445 = vmatpush1.msra.mxu0 0.0
    %1446 = vmatprep.subr.mxu0 0.0
    %1447 = vmatpush1.msra.mxu0 0.0
    %1448 = vmatprep.subr.mxu0 0.0
    %1449 = vmatpush1.msra.mxu0 0.0
    %1450 = vmatprep.subr.mxu0 0.0
    %1451 = vmatpush1.msra.mxu0 0.0
    %1452 = vmatprep.subr.mxu0 0.0
    %1453 = vmatpush1.msra.mxu0 0.0
    %1454 = vmatprep.subr.mxu0 0.0
    %1455 = vmatpush1.msra.mxu0 0.0
    %1456 = vmatprep.subr.mxu0 0.0
    %1457 = vmatpush1.msra.mxu0 0.0
    %1458 = vmatprep.subr.mxu0 0.0
    %1459 = vmatpush1.msra.mxu0 0.0
    %1460 = vmatprep.subr.mxu0 0.0
    %1461 = vmatpush1.msra.mxu0 0.0
    %1462 = vmatprep.subr.mxu0 0.0
    %1463 = vmatpush1.msra.mxu0 0.0
    %1464 = vmatprep.subr.mxu0 0.0
    %1465 = vmatpush1.msra.mxu0 0.0
    %1466 = vmatprep.subr.mxu0 0.0
    %1467 = vmatpush1.msra.mxu0 0.0
    %1468 = vmatprep.subr.mxu0 0.0
    %1469 = vmatpush1.msra.mxu0 0.0
    %1470 = vmatprep.subr.mxu0 0.0
    %1471 = vmatpush1.msra.mxu0 0.0
    %1472 = vmatprep.subr.mxu0 0.0
    %1473 = vmatpush1.msra.mxu0 0.0
    %1474 = vmatprep.subr.mxu0 0.0
    %1475 = vmatpush1.msra.mxu0 0.0
    %1476 = vmatprep.mubr.f32.mxu0 0.0
    %1477 = vmatmul.mubr.f32.gmra.mrb[0].mxu0 %v1410
    %v1478 = vpop.f32.mrb[0].mxu0
    %v1479 = vadd.f32 0.0, %v1478
    %v1480 = vpop.f32.mrb[0].mxu0
    %1481 = vdwg.mxu0
    %v1482 = vld [vmem:[%s14] sm:$0xff]
    %v1483 = vld [vmem:[%s14 + $0x8] sm:$0xff]
    %v1484 = vld [vmem:[%s14 + $0x10] sm:$0xff]
    %v1485 = vld [vmem:[%s14 + $0x18] sm:$0xff]
    %v1486 = vld [vmem:[%s14 + $0x20] sm:$0xff]
    %v1487 = vld [vmem:[%s14 + $0x28] sm:$0xff]
    %v1488 = vmax.f32 %v1072, 0.0
    %v1489 = vmax.f32 %v1243, 0.0
    %v1491 = vsel %vm274, %v1489, 0
    %1493 = vmatprep.subr.mxu0 0.0
    %1494 = vmatpush1.msra.mxu0 %v1484
    %1495 = vmatprep.subr.mxu0 0.0
    %1496 = vmatpush1.msra.mxu0 %v1485
    %1497 = vmatprep.subr.mxu0 0.0
    %1498 = vmatpush1.msra.mxu0 0.0
    %1499 = vmatprep.subr.mxu0 0.0
    %1500 = vmatpush1.msra.mxu0 0.0
    %1501 = vmatprep.subr.mxu0 0.0
    %1502 = vmatpush1.msra.mxu0 0.0
    %1503 = vmatprep.subr.mxu0 0.0
    %1504 = vmatpush1.msra.mxu0 0.0
    %1505 = vmatprep.subr.mxu0 0.0
    %1506 = vmatpush1.msra.mxu0 0.0
    %1507 = vmatprep.subr.mxu0 0.0
    %1508 = vmatpush1.msra.mxu0 0.0
    %1509 = vmatprep.subr.mxu0 0.0
    %1510 = vmatpush1.msra.mxu0 0.0
    %1511 = vmatprep.subr.mxu0 0.0
    %1512 = vmatpush1.msra.mxu0 0.0
    %1513 = vmatprep.subr.mxu0 0.0
    %1514 = vmatpush1.msra.mxu0 0.0
    %1515 = vmatprep.subr.mxu0 0.0
    %1516 = vmatpush1.msra.mxu0 0.0
    %1517 = vmatprep.subr.mxu0 0.0
    %1518 = vmatpush1.msra.mxu0 0.0
    %1519 = vmatprep.subr.mxu0 0.0
    %1520 = vmatpush1.msra.mxu0 0.0
    %1521 = vmatprep.subr.mxu0 0.0
    %1522 = vmatpush1.msra.mxu0 0.0
    %1523 = vmatprep.subr.mxu0 0.0
    %1524 = vmatpush1.msra.mxu0 0.0
    %1525 = vmatprep.subr.mxu0 0.0
    %1526 = vmatpush1.msra.mxu0 0.0
    %1527 = vmatprep.subr.mxu0 0.0
    %1528 = vmatpush1.msra.mxu0 0.0
    %1529 = vmatprep.subr.mxu0 0.0
    %1530 = vmatpush1.msra.mxu0 0.0
    %1531 = vmatprep.subr.mxu0 0.0
    %1532 = vmatpush1.msra.mxu0 0.0
    %1533 = vmatprep.subr.mxu0 0.0
    %1534 = vmatpush1.msra.mxu0 0.0
    %1535 = vmatprep.subr.mxu0 0.0
    %1536 = vmatpush1.msra.mxu0 0.0
    %1537 = vmatprep.subr.mxu0 0.0
    %1538 = vmatpush1.msra.mxu0 0.0
    %1539 = vmatprep.subr.mxu0 0.0
    %1540 = vmatpush1.msra.mxu0 0.0
    %1541 = vmatprep.subr.mxu0 0.0
    %1542 = vmatpush1.msra.mxu0 0.0
    %1543 = vmatprep.subr.mxu0 0.0
    %1544 = vmatpush1.msra.mxu0 0.0
    %1545 = vmatprep.subr.mxu0 0.0
    %1546 = vmatpush1.msra.mxu0 0.0
    %1547 = vmatprep.subr.mxu0 0.0
    %1548 = vmatpush1.msra.mxu0 0.0
    %1549 = vmatprep.subr.mxu0 0.0
    %1550 = vmatpush1.msra.mxu0 0.0
    %1551 = vmatprep.subr.mxu0 0.0
    %1552 = vmatpush1.msra.mxu0 0.0
    %1553 = vmatprep.subr.mxu0 0.0
    %1554 = vmatpush1.msra.mxu0 0.0
    %1555 = vmatprep.subr.mxu0 0.0
    %1556 = vmatpush1.msra.mxu0 0.0
    %1557 = vmatprep.mubr.f32.mxu0 0.0
    %1558 = vmatmul.mubr.f32.gmra.mrb[0].mxu0 %v1491
    %v1559 = vpop.f32.mrb[0].mxu0
    %v1560 = vadd.f32 0.0, %v1559
    %v1561 = vpop.f32.mrb[0].mxu0
    %1562 = vdwg.mxu0
    %v1564 = vrot.slane %v1488, 2
    %v1565 = vsel %vm274, %v1564, 0
    %1567 = vmatprep.subr.mxu0 0.0
    %1568 = vmatpush1.msra.mxu0 %v1482
    %1569 = vmatprep.subr.mxu0 0.0
    %1570 = vmatpush1.msra.mxu0 %v1483
    %1571 = vmatprep.subr.mxu0 0.0
    %1572 = vmatpush1.msra.mxu0 0.0
    %1573 = vmatprep.subr.mxu0 0.0
    %1574 = vmatpush1.msra.mxu0 0.0
    %1575 = vmatprep.subr.mxu0 0.0
    %1576 = vmatpush1.msra.mxu0 0.0
    %1577 = vmatprep.subr.mxu0 0.0
    %1578 = vmatpush1.msra.mxu0 0.0
    %1579 = vmatprep.subr.mxu0 0.0
    %1580 = vmatpush1.msra.mxu0 0.0
    %1581 = vmatprep.subr.mxu0 0.0
    %1582 = vmatpush1.msra.mxu0 0.0
    %1583 = vmatprep.subr.mxu0 0.0
    %1584 = vmatpush1.msra.mxu0 0.0
    %1585 = vmatprep.subr.mxu0 0.0
    %1586 = vmatpush1.msra.mxu0 0.0
    %1587 = vmatprep.subr.mxu0 0.0
    %1588 = vmatpush1.msra.mxu0 0.0
    %1589 = vmatprep.subr.mxu0 0.0
    %1590 = vmatpush1.msra.mxu0 0.0
    %1591 = vmatprep.subr.mxu0 0.0
    %1592 = vmatpush1.msra.mxu0 0.0
    %1593 = vmatprep.subr.mxu0 0.0
    %1594 = vmatpush1.msra.mxu0 0.0
    %1595 = vmatprep.subr.mxu0 0.0
    %1596 = vmatpush1.msra.mxu0 0.0
    %1597 = vmatprep.subr.mxu0 0.0
    %1598 = vmatpush1.msra.mxu0 0.0
    %1599 = vmatprep.subr.mxu0 0.0
    %1600 = vmatpush1.msra.mxu0 0.0
    %1601 = vmatprep.subr.mxu0 0.0
    %1602 = vmatpush1.msra.mxu0 0.0
    %1603 = vmatprep.subr.mxu0 0.0
    %1604 = vmatpush1.msra.mxu0 0.0
    %1605 = vmatprep.subr.mxu0 0.0
    %1606 = vmatpush1.msra.mxu0 0.0
    %1607 = vmatprep.subr.mxu0 0.0
    %1608 = vmatpush1.msra.mxu0 0.0
    %1609 = vmatprep.subr.mxu0 0.0
    %1610 = vmatpush1.msra.mxu0 0.0
    %1611 = vmatprep.subr.mxu0 0.0
    %1612 = vmatpush1.msra.mxu0 0.0
    %1613 = vmatprep.subr.mxu0 0.0
    %1614 = vmatpush1.msra.mxu0 0.0
    %1615 = vmatprep.subr.mxu0 0.0
    %1616 = vmatpush1.msra.mxu0 0.0
    %1617 = vmatprep.subr.mxu0 0.0
    %1618 = vmatpush1.msra.mxu0 0.0
    %1619 = vmatprep.subr.mxu0 0.0
    %1620 = vmatpush1.msra.mxu0 0.0
    %1621 = vmatprep.subr.mxu0 0.0
    %1622 = vmatpush1.msra.mxu0 0.0
    %1623 = vmatprep.subr.mxu0 0.0
    %1624 = vmatpush1.msra.mxu0 0.0
    %1625 = vmatprep.subr.mxu0 0.0
    %1626 = vmatpush1.msra.mxu0 0.0
    %1627 = vmatprep.subr.mxu0 0.0
    %1628 = vmatpush1.msra.mxu0 0.0
    %1629 = vmatprep.subr.mxu0 0.0
    %1630 = vmatpush1.msra.mxu0 0.0
    %1631 = vmatprep.mubr.f32.mxu0 0.0
    %1632 = vmatmul.mubr.f32.gmra.mrb[0].mxu0 %v1565
    %v1633 = vpop.f32.mrb[0].mxu0
    %v1634 = vadd.f32 %v1560, %v1633
    %v1635 = vpop.f32.mrb[0].mxu0
    %1636 = vdwg.mxu0
    %v1637 = vmax.f32 %v1479, 0.0
    %v1639 = vsel %vm274, %v1637, 0
    %1641 = vmatprep.subr.mxu0 0.0
    %1642 = vmatpush1.msra.mxu0 %v1486
    %1643 = vmatprep.subr.mxu0 0.0
    %1644 = vmatpush1.msra.mxu0 %v1487
    %1645 = vmatprep.subr.mxu0 0.0
    %1646 = vmatpush1.msra.mxu0 0.0
    %1647 = vmatprep.subr.mxu0 0.0
    %1648 = vmatpush1.msra.mxu0 0.0
    %1649 = vmatprep.subr.mxu0 0.0
    %1650 = vmatpush1.msra.mxu0 0.0
    %1651 = vmatprep.subr.mxu0 0.0
    %1652 = vmatpush1.msra.mxu0 0.0
    %1653 = vmatprep.subr.mxu0 0.0
    %1654 = vmatpush1.msra.mxu0 0.0
    %1655 = vmatprep.subr.mxu0 0.0
    %1656 = vmatpush1.msra.mxu0 0.0
    %1657 = vmatprep.subr.mxu0 0.0
    %1658 = vmatpush1.msra.mxu0 0.0
    %1659 = vmatprep.subr.mxu0 0.0
    %1660 = vmatpush1.msra.mxu0 0.0
    %1661 = vmatprep.subr.mxu0 0.0
    %1662 = vmatpush1.msra.mxu0 0.0
    %1663 = vmatprep.subr.mxu0 0.0
    %1664 = vmatpush1.msra.mxu0 0.0
    %1665 = vmatprep.subr.mxu0 0.0
    %1666 = vmatpush1.msra.mxu0 0.0
    %1667 = vmatprep.subr.mxu0 0.0
    %1668 = vmatpush1.msra.mxu0 0.0
    %1669 = vmatprep.subr.mxu0 0.0
    %1670 = vmatpush1.msra.mxu0 0.0
    %1671 = vmatprep.subr.mxu0 0.0
    %1672 = vmatpush1.msra.mxu0 0.0
    %1673 = vmatprep.subr.mxu0 0.0
    %1674 = vmatpush1.msra.mxu0 0.0
    %1675 = vmatprep.subr.mxu0 0.0
    %1676 = vmatpush1.msra.mxu0 0.0
    %1677 = vmatprep.subr.mxu0 0.0
    %1678 = vmatpush1.msra.mxu0 0.0
    %1679 = vmatprep.subr.mxu0 0.0
    %1680 = vmatpush1.msra.mxu0 0.0
    %1681 = vmatprep.subr.mxu0 0.0
    %1682 = vmatpush1.msra.mxu0 0.0
    %1683 = vmatprep.subr.mxu0 0.0
    %1684 = vmatpush1.msra.mxu0 0.0
    %1685 = vmatprep.subr.mxu0 0.0
    %1686 = vmatpush1.msra.mxu0 0.0
    %1687 = vmatprep.subr.mxu0 0.0
    %1688 = vmatpush1.msra.mxu0 0.0
    %1689 = vmatprep.subr.mxu0 0.0
    %1690 = vmatpush1.msra.mxu0 0.0
    %1691 = vmatprep.subr.mxu0 0.0
    %1692 = vmatpush1.msra.mxu0 0.0
    %1693 = vmatprep.subr.mxu0 0.0
    %1694 = vmatpush1.msra.mxu0 0.0
    %1695 = vmatprep.subr.mxu0 0.0
    %1696 = vmatpush1.msra.mxu0 0.0
    %1697 = vmatprep.subr.mxu0 0.0
    %1698 = vmatpush1.msra.mxu0 0.0
    %1699 = vmatprep.subr.mxu0 0.0
    %1700 = vmatpush1.msra.mxu0 0.0
    %1701 = vmatprep.subr.mxu0 0.0
    %1702 = vmatpush1.msra.mxu0 0.0
    %1703 = vmatprep.subr.mxu0 0.0
    %1704 = vmatpush1.msra.mxu0 0.0
    %1705 = vmatprep.mubr.f32.mxu0 0.0
    %1706 = vmatmul.mubr.f32.gmra.mrb[0].mxu0 %v1639
    %v1707 = vpop.f32.mrb[0].mxu0
    %v1708 = vadd.f32 0.0, %v1707
    %v1709 = vpop.f32.mrb[0].mxu0
    %1710 = vdwg.mxu0
    %v1711 = vadd.f32 %v1634, %v1708
    %v1712 = vld [vmem:[%s15] sm:$0x1]
    %v1713 = vadd.f32 %v1711, %v1712
    %v1714 = vmax.f32 %v1713, 0.0
    %v1715 = vld [vmem:[%s16] sm:$0xff]
    %v1716 = vld [vmem:[%s16 + $0x8] sm:$0xff]
    %v1717 = vld [vmem:[%s16 + $0x10] sm:$0xff]
    %v1718 = vld [vmem:[%s16 + $0x18] sm:$0xff]
    %v1719 = vld [vmem:[%s17] sm:$0x1]
    %v1721 = vsel %vm571, %v1714, 0
    %1723 = vmatprep.subr.mxu0 0.0
    %1724 = vmatpush1.msra.mxu0 %v1715
    %1725 = vmatprep.subr.mxu0 0.0
    %1726 = vmatpush1.msra.mxu0 %v1716
    %1727 = vmatprep.subr.mxu0 0.0
    %1728 = vmatpush1.msra.mxu0 %v1717
    %1729 = vmatprep.subr.mxu0 0.0
    %1730 = vmatpush1.msra.mxu0 %v1718
    %1731 = vmatprep.subr.mxu0 0.0
    %1732 = vmatpush1.msra.mxu0 0.0
    %1733 = vmatprep.subr.mxu0 0.0
    %1734 = vmatpush1.msra.mxu0 0.0
    %1735 = vmatprep.subr.mxu0 0.0
    %1736 = vmatpush1.msra.mxu0 0.0
    %1737 = vmatprep.subr.mxu0 0.0
    %1738 = vmatpush1.msra.mxu0 0.0
    %1739 = vmatprep.subr.mxu0 0.0
    %1740 = vmatpush1.msra.mxu0 0.0
    %1741 = vmatprep.subr.mxu0 0.0
    %1742 = vmatpush1.msra.mxu0 0.0
    %1743 = vmatprep.subr.mxu0 0.0
    %1744 = vmatpush1.msra.mxu0 0.0
    %1745 = vmatprep.subr.mxu0 0.0
    %1746 = vmatpush1.msra.mxu0 0.0
    %1747 = vmatprep.subr.mxu0 0.0
    %1748 = vmatpush1.msra.mxu0 0.0
    %1749 = vmatprep.subr.mxu0 0.0
    %1750 = vmatpush1.msra.mxu0 0.0
    %1751 = vmatprep.subr.mxu0 0.0
    %1752 = vmatpush1.msra.mxu0 0.0
    %1753 = vmatprep.subr.mxu0 0.0
    %1754 = vmatpush1.msra.mxu0 0.0
    %1755 = vmatprep.subr.mxu0 0.0
    %1756 = vmatpush1.msra.mxu0 0.0
    %1757 = vmatprep.subr.mxu0 0.0
    %1758 = vmatpush1.msra.mxu0 0.0
    %1759 = vmatprep.subr.mxu0 0.0
    %1760 = vmatpush1.msra.mxu0 0.0
    %1761 = vmatprep.subr.mxu0 0.0
    %1762 = vmatpush1.msra.mxu0 0.0
    %1763 = vmatprep.subr.mxu0 0.0
    %1764 = vmatpush1.msra.mxu0 0.0
    %1765 = vmatprep.subr.mxu0 0.0
    %1766 = vmatpush1.msra.mxu0 0.0
    %1767 = vmatprep.subr.mxu0 0.0
    %1768 = vmatpush1.msra.mxu0 0.0
    %1769 = vmatprep.subr.mxu0 0.0
    %1770 = vmatpush1.msra.mxu0 0.0
    %1771 = vmatprep.subr.mxu0 0.0
    %1772 = vmatpush1.msra.mxu0 0.0
    %1773 = vmatprep.subr.mxu0 0.0
    %1774 = vmatpush1.msra.mxu0 0.0
    %1775 = vmatprep.subr.mxu0 0.0
    %1776 = vmatpush1.msra.mxu0 0.0
    %1777 = vmatprep.subr.mxu0 0.0
    %1778 = vmatpush1.msra.mxu0 0.0
    %1779 = vmatprep.subr.mxu0 0.0
    %1780 = vmatpush1.msra.mxu0 0.0
    %1781 = vmatprep.subr.mxu0 0.0
    %1782 = vmatpush1.msra.mxu0 0.0
    %1783 = vmatprep.subr.mxu0 0.0
    %1784 = vmatpush1.msra.mxu0 0.0
    %1785 = vmatprep.subr.mxu0 0.0
    %1786 = vmatpush1.msra.mxu0 0.0
    %1787 = vmatprep.mubr.f32.mxu0 0.0
    %1788 = vmatmul.mubr.f32.gmra.mrb[0].mxu0 %v1721
    %v1789 = vpop.f32.mrb[0].mxu0
    %v1790 = vadd.f32 %v1719, %v1789
    %v1791 = vpop.f32.mrb[0].mxu0
    %1792 = vdwg.mxu0
    %1793 = vst [vmem:[#allocation12] sm:$0x1] %v1790
    // Predicated region
    $region90: #{tpu_custom_call.1} parent=1 // pred_check
      _
    $region91: #{tpu_custom_call.1} parent=1 // pred_check_branch
      %1795 = sbr.rel (0) target = $region93
    $region92: #{tpu_custom_call.1} parent=1 // pred_region
      %s1797 = ssub.s32 16, 16
      %1798 = vsyncadd [#allocation6], %s1797
      %s1800 = sshll.u32 [#allocation12], 4
      %s1801 = int_to_ptr.vmem [resolvable:$true] %s1800
      %1803 = dma.vmem_to_hbm [thread:$0]  %s1801, 16, %s18, [#allocation6]
    $region93: #{tpu_custom_call.1} parent=1 // pred_fallthru
      _
    // Predicated region
    $region94: #{tpu_custom_call.1} parent=1 // pred_check
      _
    $region95: #{tpu_custom_call.1} parent=1 // pred_check_branch
      %1805 = sbr.rel (0) target = $region97
    $region96: #{tpu_custom_call.1} parent=1 // pred_region
      %1806 = dma.done [#allocation6], 16
    $region97: #{tpu_custom_call.1} parent=1 // pred_fallthru
      _
    %1807 = vsyncpa [#allocation5], 1
    %1808 = vsyncpa [#allocation8], 1
    %1809 = vsyncpa [#allocation11], 1
    %1810 = vsyncpa [#allocation6], 1

</llo_original>
